<compile_context>
chip_gen: v7x
topology: tpu7x:2x2x1
jax: 0.10.0
libtpu: 0.0.40
codegen_flags: <defaults>
</compile_context>

<pallas_src>
import jax
import jax.numpy as jnp
from jax.experimental import pallas as pl
from jax.experimental.pallas import tpu as pltpu

SEED_DIM = 100
LABEL_DIM = 10
IN_DIM = SEED_DIM + LABEL_DIM      # 110
IN_PAD = 128                       # lane-aligned input width (zero-padded)
HID_DIM = 200
OUT_DIM = 784
LN_EPS = 1e-5
LRELU_SLOPE = 0.02
MAX_TILE_M = 512                   # upper bound on rows per grid step


def _round_up(x, m):
    return ((x + m - 1) // m) * m


def _choose_tile(batch):
    """Batch tile: large (amortize per-step overhead) but keep >=2 grid steps
    when the batch allows it (v7x megacore sharding of the parallel axis)."""
    bp = _round_up(batch, 8)
    if bp <= 16:
        return bp
    return min(MAX_TILE_M, _round_up(-(-bp // 2), 8))


def generator_kernel(x_ref, w1_ref, b1_ref, gamma_ref, beta_ref,
                     w2_ref, b2_ref, o_ref):
    # ---- Linear(110 -> 200), fused concat via zero-padded (TM,128)@(128,200)
    x = x_ref[...]                                               # (TM, 128) bf16
    h = jnp.dot(x, w1_ref[...],
                preferred_element_type=jnp.float32) + b1_ref[...]   # (TM, 200) f32

    # ---- LeakyReLU(0.02) ----------------------------------------------------
    h = jnp.where(h > 0, h, LRELU_SLOPE * h)

    # ---- LayerNorm(200), elementwise affine (biased variance, like PyTorch) -
    mean = jnp.mean(h, axis=-1, keepdims=True)
    centered = h - mean
    var = jnp.mean(centered * centered, axis=-1, keepdims=True)
    h = centered * jax.lax.rsqrt(var + LN_EPS) * gamma_ref[...] + beta_ref[...]

    # ---- Linear(200 -> 784) + Sigmoid ---------------------------------------
    # W2/b2 carry a folded 0.5, so y = 0.5 * (original pre-activation) and
    # sigmoid(2y) == 0.5*tanh(y) + 0.5 (EUP tanh, no divide, no inf, one fewer
    # full-slab VPU multiply).
    y = jnp.dot(h.astype(jnp.bfloat16), w2_ref[...],
                preferred_element_type=jnp.float32) + b2_ref[...]    # (TM, 784)
    o_ref[...] = (0.5 * jnp.tanh(y) + 0.5).astype(jnp.bfloat16)


@jax.jit
def generator_forward(seed, label, params):
    """seed: (B, 100) f32, label: (B, 10) f32 -> (B, 784) bf16."""
    w1p, b1, gamma, beta, w2h, b2h = params
    B = seed.shape[0]
    tile = _choose_tile(B)
    Bp = _round_up(B, tile)
    n_tiles = Bp // tile

    # Lane-aligned zero-padded input slab (Bp, 128) bf16, one fused concat+pad.
    x = jnp.concatenate([seed, label], axis=-1).astype(jnp.bfloat16)
    x = jnp.pad(x, ((0, Bp - B), (0, IN_PAD - IN_DIM)))

    const = lambda i: (0, 0)   # weights: same block every step -> VMEM-resident

    out = pl.pallas_call(
        generator_kernel,
        out_shape=jax.ShapeDtypeStruct((Bp, OUT_DIM), jnp.bfloat16),
        grid=(n_tiles,),
        in_specs=[
            pl.BlockSpec((tile, IN_PAD), lambda i: (i, 0)),     # x batch tile
            pl.BlockSpec((IN_PAD, HID_DIM), const),             # W1 (padded rows)
            pl.BlockSpec((1, HID_DIM), const),                  # b1
            pl.BlockSpec((1, HID_DIM), const),                  # gamma
            pl.BlockSpec((1, HID_DIM), const),                  # beta
            pl.BlockSpec((HID_DIM, OUT_DIM), const),            # W2 (0.5-folded)
            pl.BlockSpec((1, OUT_DIM), const),                  # b2 (0.5-folded)
        ],
        out_specs=pl.BlockSpec((tile, OUT_DIM), lambda i: (i, 0)),
        compiler_params=pltpu.CompilerParams(
            dimension_semantics=("parallel",)),
    )(x, w1p, b1, gamma, beta, w2h, b2h)

    # No feature-dim slice anymore; only a cheap row slice if B was padded.
    return out if Bp == B else out[:B]


def init_params(key):
    """PyTorch-style Linear init; W1 padded + bf16, W2/b2 carry a folded 0.5."""
    k1, k2, k3, k4 = jax.random.split(key, 4)

    bound1 = 1.0 / jnp.sqrt(IN_DIM)
    w1 = jax.random.uniform(k1, (IN_DIM, HID_DIM), jnp.float32, -bound1, bound1)
    b1 = jax.random.uniform(k2, (HID_DIM,), jnp.float32, -bound1, bound1)
    gamma = jnp.ones((HID_DIM,), jnp.float32)   # LayerNorm default weight
    beta = jnp.zeros((HID_DIM,), jnp.float32)   # LayerNorm default bias

    bound2 = 1.0 / jnp.sqrt(HID_DIM)
    w2 = jax.random.uniform(k3, (HID_DIM, OUT_DIM), jnp.float32, -bound2, bound2)
    b2 = jax.random.uniform(k4, (OUT_DIM,), jnp.float32, -bound2, bound2)

    # W1: rows 110..127 zero (fused concat). W2/b2: scaled by 0.5 once so the
    # kernel's sigmoid epilogue is 0.5*tanh(y)+0.5 with no extra multiply.
    w1p = jnp.zeros((IN_PAD, HID_DIM), jnp.float32).at[:IN_DIM].set(w1)
    w2h = 0.5 * w2
    b2h = 0.5 * b2

    return (w1p.astype(jnp.bfloat16),
            b1.reshape(1, HID_DIM),
            gamma.reshape(1, HID_DIM),
            beta.reshape(1, HID_DIM),
            w2h.astype(jnp.bfloat16),
            b2h.reshape(1, OUT_DIM))


def reference_forward(seed, label, params):
    """Plain-JAX reference using the same bf16-weight / f32-accum recipe."""
    w1p, b1, gamma, beta, w2h, b2h = params
    w1 = w1p[:IN_DIM]                       # bf16 (110, 200)

    x = jnp.concatenate([seed, label], axis=-1).astype(jnp.bfloat16)
    h = jnp.dot(x, w1, preferred_element_type=jnp.float32) + b1
    h = jnp.where(h > 0, h, LRELU_SLOPE * h)
    mean = h.mean(axis=-1, keepdims=True)
    var = ((h - mean) ** 2).mean(axis=-1, keepdims=True)
    h = (h - mean) * jax.lax.rsqrt(var + LN_EPS) * gamma + beta
    y = jnp.dot(h.astype(jnp.bfloat16), w2h,
                preferred_element_type=jnp.float32) + b2h
    return jax.nn.sigmoid(2.0 * y)          # w2h/b2h carry the folded 0.5


if __name__ == "__main__":
    key = jax.random.PRNGKey(0)
    kp, ks, kl = jax.random.split(key, 3)

    params = init_params(kp)

    B = 256  # two 128-row grid steps; exercises batching + parallel grid axis
    seed = jax.random.normal(ks, (B, SEED_DIM), jnp.float32)
    label_idx = jax.random.randint(kl, (B,), 0, LABEL_DIM)
    label = jax.nn.one_hot(label_idx, LABEL_DIM, dtype=jnp.float32)

    out = generator_forward(seed, label, params)
    out = jax.block_until_ready(out)

    ref = reference_forward(seed, label, params)
    assert out.shape == (B, OUT_DIM), out.shape
    max_err = float(jnp.max(jnp.abs(out.astype(jnp.float32) - ref)))
    assert max_err < 1e-2, f"max err {max_err}"

    print("KERNEL_OK")
</pallas_src>

<mosaic_0001>
module attributes {stable_mosaic.version = 11 : i64} {
  func.func @generator_kernel(%arg0: i32, %arg1: memref<128x128xbf16, #tpu.memory_space<vmem>>, %arg2: memref<128x200xbf16, #tpu.memory_space<vmem>>, %arg3: memref<1x200xf32, #tpu.memory_space<vmem>>, %arg4: memref<1x200xf32, #tpu.memory_space<vmem>>, %arg5: memref<1x200xf32, #tpu.memory_space<vmem>>, %arg6: memref<200x784xbf16, #tpu.memory_space<vmem>>, %arg7: memref<1x784xf32, #tpu.memory_space<vmem>>, %arg8: memref<128x784xbf16, #tpu.memory_space<vmem>>) attributes {dimension_semantics = [#tpu.dimension_semantics<parallel>], iteration_bounds = array<i64: 2>, scalar_prefetch = 0 : i64, scratch_operands = 0 : i64, tpu.core_type = #tpu.core_type<tc>, window_params = [{transform_indices = @transform_0, window_bounds = array<i64: 128, 128>}, {pipeline_mode = #tpu.pipeline_mode<synchronous>, transform_indices = @transform_1, window_bounds = array<i64: 128, 200>}, {pipeline_mode = #tpu.pipeline_mode<synchronous>, transform_indices = @transform_2, window_bounds = array<i64: 1, 200>}, {pipeline_mode = #tpu.pipeline_mode<synchronous>, transform_indices = @transform_3, window_bounds = array<i64: 1, 200>}, {pipeline_mode = #tpu.pipeline_mode<synchronous>, transform_indices = @transform_4, window_bounds = array<i64: 1, 200>}, {pipeline_mode = #tpu.pipeline_mode<synchronous>, transform_indices = @transform_5, window_bounds = array<i64: 200, 784>}, {pipeline_mode = #tpu.pipeline_mode<synchronous>, transform_indices = @transform_6, window_bounds = array<i64: 1, 784>}, {transform_indices = @transform_7, window_bounds = array<i64: 128, 784>}]} {
    %c0 = arith.constant 0 : index
    %c0_0 = arith.constant 0 : index
    %0 = vector.load %arg1[%c0, %c0_0] : memref<128x128xbf16, #tpu.memory_space<vmem>>, vector<128x128xbf16>
    %c0_1 = arith.constant 0 : index
    %c0_2 = arith.constant 0 : index
    %1 = vector.load %arg2[%c0_1, %c0_2] : memref<128x200xbf16, #tpu.memory_space<vmem>>, vector<128x200xbf16>
    %cst = arith.constant dense<0.000000e+00> : vector<128x200xf32>
    %2 = tpu.matmul %0, %1, %cst {dimension_numbers = #tpu.dot_dimension_numbers<[1], [0], [0], [1], [0, 0, 1, 1], [], []>} : vector<128x128xbf16>, vector<128x200xbf16>, vector<128x200xf32> -> vector<128x200xf32>
    %c0_3 = arith.constant 0 : index
    %c0_4 = arith.constant 0 : index
    %3 = vector.load %arg3[%c0_3, %c0_4] : memref<1x200xf32, #tpu.memory_space<vmem>>, vector<1x200xf32>
    %4 = vector.broadcast %3 : vector<1x200xf32> to vector<128x200xf32>
    %5 = arith.addf %2, %4 : vector<128x200xf32>
    %cst_5 = arith.constant 0.000000e+00 : f32
    %6 = vector.broadcast %cst_5 : f32 to vector<128x200xf32>
    %7 = arith.cmpf ogt, %5, %6 : vector<128x200xf32>
    %cst_6 = arith.constant 2.000000e-02 : f32
    %8 = vector.broadcast %cst_6 : f32 to vector<128x200xf32>
    %9 = arith.mulf %8, %5 : vector<128x200xf32>
    %10 = arith.select %7, %5, %9 : vector<128x200xi1>, vector<128x200xf32>
    %cst_7 = arith.constant dense<0.000000e+00> : vector<128xf32>
    %11 = vector.multi_reduction <add>, %10, %cst_7 [1] : vector<128x200xf32> to vector<128xf32>
    %12 = vector.shape_cast %11 : vector<128xf32> to vector<128x1xf32>
    %cst_8 = arith.constant 2.000000e+02 : f32
    %13 = vector.broadcast %cst_8 : f32 to vector<128x1xf32>
    %14 = arith.divf %12, %13 : vector<128x1xf32>
    %15 = vector.broadcast %14 : vector<128x1xf32> to vector<128x200xf32>
    %16 = arith.subf %10, %15 : vector<128x200xf32>
    %17 = arith.mulf %16, %16 : vector<128x200xf32>
    %cst_9 = arith.constant dense<0.000000e+00> : vector<128xf32>
    %18 = vector.multi_reduction <add>, %17, %cst_9 [1] : vector<128x200xf32> to vector<128xf32>
    %19 = vector.shape_cast %18 : vector<128xf32> to vector<128x1xf32>
    %cst_10 = arith.constant 2.000000e+02 : f32
    %20 = vector.broadcast %cst_10 : f32 to vector<128x1xf32>
    %21 = arith.divf %19, %20 : vector<128x1xf32>
    %cst_11 = arith.constant 9.99999974E-6 : f32
    %22 = vector.broadcast %cst_11 : f32 to vector<128x1xf32>
    %23 = arith.addf %21, %22 : vector<128x1xf32>
    %24 = math.rsqrt %23 : vector<128x1xf32>
    %25 = vector.broadcast %24 : vector<128x1xf32> to vector<128x200xf32>
    %26 = arith.mulf %16, %25 : vector<128x200xf32>
    %c0_12 = arith.constant 0 : index
    %c0_13 = arith.constant 0 : index
    %27 = vector.load %arg4[%c0_12, %c0_13] : memref<1x200xf32, #tpu.memory_space<vmem>>, vector<1x200xf32>
    %28 = vector.broadcast %27 : vector<1x200xf32> to vector<128x200xf32>
    %29 = arith.mulf %26, %28 : vector<128x200xf32>
    %c0_14 = arith.constant 0 : index
    %c0_15 = arith.constant 0 : index
    %30 = vector.load %arg5[%c0_14, %c0_15] : memref<1x200xf32, #tpu.memory_space<vmem>>, vector<1x200xf32>
    %31 = vector.broadcast %30 : vector<1x200xf32> to vector<128x200xf32>
    %32 = arith.addf %29, %31 : vector<128x200xf32>
    %33 = arith.truncf %32 : vector<128x200xf32> to vector<128x200xbf16>
    %c0_16 = arith.constant 0 : index
    %c0_17 = arith.constant 0 : index
    %34 = vector.load %arg6[%c0_16, %c0_17] : memref<200x784xbf16, #tpu.memory_space<vmem>>, vector<200x784xbf16>
    %cst_18 = arith.constant dense<0.000000e+00> : vector<128x784xf32>
    %35 = tpu.matmul %33, %34, %cst_18 {dimension_numbers = #tpu.dot_dimension_numbers<[1], [0], [0], [1], [0, 0, 1, 1], [], []>} : vector<128x200xbf16>, vector<200x784xbf16>, vector<128x784xf32> -> vector<128x784xf32>
    %c0_19 = arith.constant 0 : index
    %c0_20 = arith.constant 0 : index
    %36 = vector.load %arg7[%c0_19, %c0_20] : memref<1x784xf32, #tpu.memory_space<vmem>>, vector<1x784xf32>
    %37 = vector.broadcast %36 : vector<1x784xf32> to vector<128x784xf32>
    %38 = arith.addf %35, %37 : vector<128x784xf32>
    %39 = math.tanh %38 : vector<128x784xf32>
    %cst_21 = arith.constant 5.000000e-01 : f32
    %40 = vector.broadcast %cst_21 : f32 to vector<128x784xf32>
    %41 = arith.mulf %40, %39 : vector<128x784xf32>
    %cst_22 = arith.constant 5.000000e-01 : f32
    %42 = vector.broadcast %cst_22 : f32 to vector<128x784xf32>
    %43 = arith.addf %41, %42 : vector<128x784xf32>
    %44 = arith.truncf %43 : vector<128x784xf32> to vector<128x784xbf16>
    %c0_23 = arith.constant 0 : index
    %c0_24 = arith.constant 0 : index
    %45 = vector.load %arg8[%c0_23, %c0_24] : memref<128x784xbf16, #tpu.memory_space<vmem>>, vector<128x784xbf16>
    tpu.vector_store %arg8[%c0_23, %c0_24], %44 {strides = array<i32>} : memref<128x784xbf16, #tpu.memory_space<vmem>>, vector<128x784xbf16>,
    return
  }
  func.func @transform_0(%arg0: i32) -> (i32, i32) {
    %c0_i32 = arith.constant 0 : i32
    %c0_i32_0 = arith.constant 0 : i32
    return %arg0, %c0_i32 : i32, i32
  }
  func.func @transform_1(%arg0: i32) -> (i32, i32) {
    %c0_i32 = arith.constant 0 : i32
    %c0_i32_0 = arith.constant 0 : i32
    %c0_i32_1 = arith.constant 0 : i32
    return %c0_i32, %c0_i32_0 : i32, i32
  }
  func.func @transform_2(%arg0: i32) -> (i32, i32) {
    %c0_i32 = arith.constant 0 : i32
    %c0_i32_0 = arith.constant 0 : i32
    %c0_i32_1 = arith.constant 0 : i32
    return %c0_i32, %c0_i32_0 : i32, i32
  }
  func.func @transform_3(%arg0: i32) -> (i32, i32) {
    %c0_i32 = arith.constant 0 : i32
    %c0_i32_0 = arith.constant 0 : i32
    %c0_i32_1 = arith.constant 0 : i32
    return %c0_i32, %c0_i32_0 : i32, i32
  }
  func.func @transform_4(%arg0: i32) -> (i32, i32) {
    %c0_i32 = arith.constant 0 : i32
    %c0_i32_0 = arith.constant 0 : i32
    %c0_i32_1 = arith.constant 0 : i32
    return %c0_i32, %c0_i32_0 : i32, i32
  }
  func.func @transform_5(%arg0: i32) -> (i32, i32) {
    %c0_i32 = arith.constant 0 : i32
    %c0_i32_0 = arith.constant 0 : i32
    %c0_i32_1 = arith.constant 0 : i32
    return %c0_i32, %c0_i32_0 : i32, i32
  }
  func.func @transform_6(%arg0: i32) -> (i32, i32) {
    %c0_i32 = arith.constant 0 : i32
    %c0_i32_0 = arith.constant 0 : i32
    %c0_i32_1 = arith.constant 0 : i32
    return %c0_i32, %c0_i32_0 : i32, i32
  }
  func.func @transform_7(%arg0: i32) -> (i32, i32) {
    %c0_i32 = arith.constant 0 : i32
    %c0_i32_0 = arith.constant 0 : i32
    return %arg0, %c0_i32 : i32, i32
  }
}

</mosaic_0001>

<llo_original>
// kernel: generator_forward.1
$region0: #{generator_forward.1}
  #allocation0 [shape = 'u32[]', space=smem, size = 0x4, offset = 0x4, fixed_abs, tag = 'smem constant byte address 0x4 - core index']
  #allocation1 [shape = 'u32[144,128]{1,0:T(1,128)}', space=vmem, size = 0x12000, scoped, tag = 'internal scratch']
  %s0 = inlined_call_operand.vmem [shape: bf16[256,128], index: 0, kind: input, shape index: {}]
  %s1 = inlined_call_operand.vmem [shape: bf16[128,200], index: 1, kind: input, shape index: {}]
  %s2 = inlined_call_operand.vmem [shape: f32[1,200], index: 2, kind: input, shape index: {}]
  %s3 = inlined_call_operand.vmem [shape: f32[1,200], index: 3, kind: input, shape index: {}]
  %s4 = inlined_call_operand.vmem [shape: f32[1,200], index: 4, kind: input, shape index: {}]
  %s5 = inlined_call_operand.vmem [shape: bf16[200,784], index: 5, kind: input, shape index: {}]
  %s6 = inlined_call_operand.vmem [shape: f32[1,784], index: 6, kind: input, shape index: {}]
  %s7 = inlined_call_operand.vmem [shape: bf16[256,784], index: 7, kind: output, shape index: {}]
  %s8 = sld [smem:[#allocation0]]
  $region61: #{generator_forward.1} parent=0
    _
  %s10 = ssub.s32 1, %s8
  %s11 = scalar_select 0, %s10, %s8
  loop: start=0, step=1, limit=4
  $region2: #{generator_forward.1} parent=0 // loop_pre_header
    _
  $region3: #{generator_forward.1} parent=0 // loop_header
    %s13 = sphi 0, %s17
    %p14 = scmp.ge.s32.totalorder %s13, 4
    %s23 = sphi 0, %s25
    %s26 = sphi 0, %s23
    %s27 = sphi 0, %s26
    %s43 = sphi 0, %s27
    %s47 = sphi 0, %s47
    %s49 = sphi 0, %s47
    %s50 = sphi 0, %s49
    %s64 = sphi 0, %s50
    %s68 = sphi 0, %s68
    %s70 = sphi 0, %s68
    %s71 = sphi 0, %s70
    %s85 = sphi 0, %s71
    %s89 = sphi 0, %s89
    %s91 = sphi 0, %s89
    %s92 = sphi 0, %s91
    %s106 = sphi 0, %s92
    %s110 = sphi 0, %s110
    %s112 = sphi 0, %s110
    %s113 = sphi 0, %s112
    %s127 = sphi 0, %s113
    %s131 = sphi 0, %s131
    %s133 = sphi 0, %s131
    %s134 = sphi 0, %s133
    %s148 = sphi 0, %s134
    %s152 = sphi 0, %s152
    %s154 = sphi 0, %s152
    %s155 = sphi 0, %s154
    %s169 = sphi 0, %s155
    %s175 = sphi 0, %s177
    %s178 = sphi 0, %s175
    %s179 = sphi 0, %s178
    %s195 = sphi 0, %s179
  $region4: #{generator_forward.1} parent=0 // loop_header_branch
    %16 = sbr.rel (%p14) target = $region8
  $region5: #{generator_forward.1} parent=0 // loop_body
    %s18 = ssub.s32 %s13, 1
    %s19 = ssub.s32 %s13, 2
    %s20 = sadd.s32 %s13, 1
    %s21 = ssub.s32 %s13, %s20
    %p22 = scmp.eq.s32.totalorder %s21, 0
    %s24 = sadd.s32 %s23, 1
    %s25 = scalar_select %p22, %s23, %s24
    %p28 = pneg %p22
    %p29 = scmp.eq.s32.totalorder %s13, 1
    %p30 = por %p28, %p29
    %p31 = scmp.ne.s32.totalorder %s23, %s26
    %p32 = scmp.eq.s32.totalorder %s13, 0
    %p33 = por %p31, %p32
    %p34 = scmp.ne.s32.totalorder %s23, %s26
    %p35 = scmp.eq.s32.totalorder %s18, 1
    %p36 = por %p34, %p35
    %p37 = scmp.ne.s32.totalorder %s26, %s27
    %p38 = scmp.eq.s32.totalorder %s18, 0
    %p39 = por %p37, %p38
    %p40 = scmp.ne.s32.totalorder %s26, %s27
    %p41 = scmp.eq.s32.totalorder %s19, 1
    %p42 = por %p40, %p41
    %p44 = scmp.ne.s32.totalorder %s27, %s43
    %p45 = scmp.eq.s32.totalorder %s19, 0
    %p46 = por %p44, %p45
    %s48 = sadd.s32 %s47, 1
    %p51 = scmp.eq.s32.totalorder %s13, 1
    %p52 = scmp.ne.s32.totalorder %s47, %s49
    %p53 = scmp.eq.s32.totalorder %s13, 0
    %p54 = por %p52, %p53
    %p55 = scmp.ne.s32.totalorder %s47, %s49
    %p56 = scmp.eq.s32.totalorder %s18, 1
    %p57 = por %p55, %p56
    %p58 = scmp.ne.s32.totalorder %s49, %s50
    %p59 = scmp.eq.s32.totalorder %s18, 0
    %p60 = por %p58, %p59
    %p61 = scmp.ne.s32.totalorder %s49, %s50
    %p62 = scmp.eq.s32.totalorder %s19, 1
    %p63 = por %p61, %p62
    %p65 = scmp.ne.s32.totalorder %s50, %s64
    %p66 = scmp.eq.s32.totalorder %s19, 0
    %p67 = por %p65, %p66
    %s69 = sadd.s32 %s68, 1
    %p72 = scmp.eq.s32.totalorder %s13, 1
    %p73 = scmp.ne.s32.totalorder %s68, %s70
    %p74 = scmp.eq.s32.totalorder %s13, 0
    %p75 = por %p73, %p74
    %p76 = scmp.ne.s32.totalorder %s68, %s70
    %p77 = scmp.eq.s32.totalorder %s18, 1
    %p78 = por %p76, %p77
    %p79 = scmp.ne.s32.totalorder %s70, %s71
    %p80 = scmp.eq.s32.totalorder %s18, 0
    %p81 = por %p79, %p80
    %p82 = scmp.ne.s32.totalorder %s70, %s71
    %p83 = scmp.eq.s32.totalorder %s19, 1
    %p84 = por %p82, %p83
    %p86 = scmp.ne.s32.totalorder %s71, %s85
    %p87 = scmp.eq.s32.totalorder %s19, 0
    %p88 = por %p86, %p87
    %s90 = sadd.s32 %s89, 1
    %p93 = scmp.eq.s32.totalorder %s13, 1
    %p94 = scmp.ne.s32.totalorder %s89, %s91
    %p95 = scmp.eq.s32.totalorder %s13, 0
    %p96 = por %p94, %p95
    %p97 = scmp.ne.s32.totalorder %s89, %s91
    %p98 = scmp.eq.s32.totalorder %s18, 1
    %p99 = por %p97, %p98
    %p100 = scmp.ne.s32.totalorder %s91, %s92
    %p101 = scmp.eq.s32.totalorder %s18, 0
    %p102 = por %p100, %p101
    %p103 = scmp.ne.s32.totalorder %s91, %s92
    %p104 = scmp.eq.s32.totalorder %s19, 1
    %p105 = por %p103, %p104
    %p107 = scmp.ne.s32.totalorder %s92, %s106
    %p108 = scmp.eq.s32.totalorder %s19, 0
    %p109 = por %p107, %p108
    %s111 = sadd.s32 %s110, 1
    %p114 = scmp.eq.s32.totalorder %s13, 1
    %p115 = scmp.ne.s32.totalorder %s110, %s112
    %p116 = scmp.eq.s32.totalorder %s13, 0
    %p117 = por %p115, %p116
    %p118 = scmp.ne.s32.totalorder %s110, %s112
    %p119 = scmp.eq.s32.totalorder %s18, 1
    %p120 = por %p118, %p119
    %p121 = scmp.ne.s32.totalorder %s112, %s113
    %p122 = scmp.eq.s32.totalorder %s18, 0
    %p123 = por %p121, %p122
    %p124 = scmp.ne.s32.totalorder %s112, %s113
    %p125 = scmp.eq.s32.totalorder %s19, 1
    %p126 = por %p124, %p125
    %p128 = scmp.ne.s32.totalorder %s113, %s127
    %p129 = scmp.eq.s32.totalorder %s19, 0
    %p130 = por %p128, %p129
    %s132 = sadd.s32 %s131, 1
    %p135 = scmp.eq.s32.totalorder %s13, 1
    %p136 = scmp.ne.s32.totalorder %s131, %s133
    %p137 = scmp.eq.s32.totalorder %s13, 0
    %p138 = por %p136, %p137
    %p139 = scmp.ne.s32.totalorder %s131, %s133
    %p140 = scmp.eq.s32.totalorder %s18, 1
    %p141 = por %p139, %p140
    %p142 = scmp.ne.s32.totalorder %s133, %s134
    %p143 = scmp.eq.s32.totalorder %s18, 0
    %p144 = por %p142, %p143
    %p145 = scmp.ne.s32.totalorder %s133, %s134
    %p146 = scmp.eq.s32.totalorder %s19, 1
    %p147 = por %p145, %p146
    %p149 = scmp.ne.s32.totalorder %s134, %s148
    %p150 = scmp.eq.s32.totalorder %s19, 0
    %p151 = por %p149, %p150
    %s153 = sadd.s32 %s152, 1
    %p156 = scmp.eq.s32.totalorder %s13, 1
    %p157 = scmp.ne.s32.totalorder %s152, %s154
    %p158 = scmp.eq.s32.totalorder %s13, 0
    %p159 = por %p157, %p158
    %p160 = scmp.ne.s32.totalorder %s152, %s154
    %p161 = scmp.eq.s32.totalorder %s18, 1
    %p162 = por %p160, %p161
    %p163 = scmp.ne.s32.totalorder %s154, %s155
    %p164 = scmp.eq.s32.totalorder %s18, 0
    %p165 = por %p163, %p164
    %p166 = scmp.ne.s32.totalorder %s154, %s155
    %p167 = scmp.eq.s32.totalorder %s19, 1
    %p168 = por %p166, %p167
    %p170 = scmp.ne.s32.totalorder %s155, %s169
    %p171 = scmp.eq.s32.totalorder %s19, 0
    %p172 = por %p170, %p171
    %s173 = ssub.s32 %s13, %s20
    %p174 = scmp.eq.s32.totalorder %s173, 0
    %s176 = sadd.s32 %s175, 1
    %s177 = scalar_select %p174, %s175, %s176
    %p180 = pneg %p174
    %p181 = scmp.eq.s32.totalorder %s13, 1
    %p182 = por %p180, %p181
    %p183 = scmp.ne.s32.totalorder %s175, %s178
    %p184 = scmp.eq.s32.totalorder %s13, 0
    %p185 = por %p183, %p184
    %p186 = scmp.ne.s32.totalorder %s175, %s178
    %p187 = scmp.eq.s32.totalorder %s18, 1
    %p188 = por %p186, %p187
    %p189 = scmp.ne.s32.totalorder %s178, %s179
    %p190 = scmp.eq.s32.totalorder %s18, 0
    %p191 = por %p189, %p190
    %p192 = scmp.ne.s32.totalorder %s178, %s179
    %p193 = scmp.eq.s32.totalorder %s19, 1
    %p194 = por %p192, %p193
    %p196 = scmp.ne.s32.totalorder %s179, %s195
    %p197 = scmp.eq.s32.totalorder %s19, 0
    %p198 = por %p196, %p197
    %p199 = scmp.le.s32.totalorder 1, %s13
    %p200 = scmp.lt.s32.totalorder %s13, 3
    %p201 = pnand %p199, %p200
    %p202 = pneg %p201
    // Predicated region
    $region9: #{generator_forward.1} parent=5 // pred_check
      _
    $region10: #{generator_forward.1} parent=5 // pred_check_branch
      %204 = sbr.rel (%p201) target = $region12
    $region11: #{generator_forward.1} parent=5 // pred_region
      %s205 = ssub.s32 %s13, 1
      // Predicated region
      $region13: #{generator_forward.1} parent=11 // pred_check
        %p206 = pneg %p60
      $region14: #{generator_forward.1} parent=11 // pred_check_branch
        %208 = sbr.rel (%p206) target = $region16
      $region15: #{generator_forward.1} parent=11 // pred_region
        _
      $region16: #{generator_forward.1} parent=11 // pred_fallthru
        _
      // Predicated region
      $region17: #{generator_forward.1} parent=11 // pred_check
        %p209 = pneg %p81
      $region18: #{generator_forward.1} parent=11 // pred_check_branch
        %211 = sbr.rel (%p209) target = $region20
      $region19: #{generator_forward.1} parent=11 // pred_region
        _
      $region20: #{generator_forward.1} parent=11 // pred_fallthru
        _
      // Predicated region
      $region21: #{generator_forward.1} parent=11 // pred_check
        %p212 = pneg %p102
      $region22: #{generator_forward.1} parent=11 // pred_check_branch
        %214 = sbr.rel (%p212) target = $region24
      $region23: #{generator_forward.1} parent=11 // pred_region
        _
      $region24: #{generator_forward.1} parent=11 // pred_fallthru
        _
      // Predicated region
      $region25: #{generator_forward.1} parent=11 // pred_check
        %p215 = pneg %p123
      $region26: #{generator_forward.1} parent=11 // pred_check_branch
        %217 = sbr.rel (%p215) target = $region28
      $region27: #{generator_forward.1} parent=11 // pred_region
        _
      $region28: #{generator_forward.1} parent=11 // pred_fallthru
        _
      // Predicated region
      $region29: #{generator_forward.1} parent=11 // pred_check
        %p218 = pneg %p144
      $region30: #{generator_forward.1} parent=11 // pred_check_branch
        %220 = sbr.rel (%p218) target = $region32
      $region31: #{generator_forward.1} parent=11 // pred_region
        _
      $region32: #{generator_forward.1} parent=11 // pred_fallthru
        _
      // Predicated region
      $region33: #{generator_forward.1} parent=11 // pred_check
        %p221 = pneg %p165
      $region34: #{generator_forward.1} parent=11 // pred_check_branch
        %223 = sbr.rel (%p221) target = $region36
      $region35: #{generator_forward.1} parent=11 // pred_region
        _
      $region36: #{generator_forward.1} parent=11 // pred_fallthru
        _
    $region12: #{generator_forward.1} parent=5 // pred_fallthru
      _
    %p224 = scmp.lt.s32.totalorder %s13, 2
    // Predicated region
    $region37: #{generator_forward.1} parent=5 // pred_check
      %p225 = pneg %p224
    $region38: #{generator_forward.1} parent=5 // pred_check_branch
      %227 = sbr.rel (%p225) target = $region40
    $region39: #{generator_forward.1} parent=5 // pred_region
      // Predicated region
      $region41: #{generator_forward.1} parent=39 // pred_check
        %p228 = pneg %p33
      $region42: #{generator_forward.1} parent=39 // pred_check_branch
        %230 = sbr.rel (%p228) target = $region44
      $region43: #{generator_forward.1} parent=39 // pred_region
        %s231 = smul.u32 16, %s13
        %p232 = scmp.lt.s32.totalorder %s231, 31
        %s233 = scalar_select %p232, %s231, 31
        %s234 = smul.addr %s233, 4
        %s235 = scalar_lea.vmem %s0, %s234
        %s236 = smul.u32 16, %s13
      $region44: #{generator_forward.1} parent=39 // pred_fallthru
        _
    $region40: #{generator_forward.1} parent=5 // pred_fallthru
      _
    %p237 = scmp.le.s32.totalorder 1, %s13
    %p238 = scmp.lt.s32.totalorder %s13, 3
    %p239 = pnand %p237, %p238
    %p240 = pneg %p239
    // Predicated region
    $region45: #{generator_forward.1} parent=5 // pred_check
      _
    $region46: #{generator_forward.1} parent=5 // pred_check_branch
      %242 = sbr.rel (%p239) target = $region48
    $region47: #{generator_forward.1} parent=5 // pred_region
      %s243 = ssub.s32 %s13, 1
      %s244 = smul.u32 16, %s18
      %p245 = scmp.lt.s32.totalorder %s244, 31
      %s246 = scalar_select %p245, %s244, 31
      %s247 = smul.addr %s246, 4
      %s248 = scalar_lea.vmem %s0, %s247
      %p249 = pneg %p39
      %p250 = pneg %p36
      %p251 = pneg %p60
      %p252 = pneg %p57
      %p253 = pneg %p81
      %p254 = pneg %p78
      %p255 = pneg %p102
      %p256 = pneg %p99
      %p257 = pneg %p123
      %p258 = pneg %p120
      %p259 = pneg %p144
      %p260 = pneg %p141
      %p261 = pneg %p165
      %p262 = pneg %p162
      %p263 = pneg %p191
      %p264 = pneg %p188
      %s265 = smul.u32 16, %s18
      %p266 = scmp.lt.s32.totalorder %s265, 31
      %s267 = scalar_select %p266, %s265, 31
      %s268 = smul.addr %s267, 7
      %s269 = smul.addr %s268, 4
      %s270 = scalar_lea.vmem %s7, %s269
      %s271 = smul.u32 16, %s18
      %p272 = scmp.lt.s32.totalorder %s271, 31
      %s273 = scalar_select %p272, %s271, 31
      %s274 = smul.addr %s273, 4
      %s275 = scalar_lea.vmem %s0, %s274
      %s276 = smul.u32 16, %s18
      %s277 = smul.u32 16, %s18
      %p278 = scmp.lt.s32.totalorder %s277, 31
      %s279 = scalar_select %p278, %s277, 31
      %s280 = smul.addr %s279, 7
      %s281 = smul.addr %s280, 4
      %s282 = scalar_lea.vmem %s7, %s281
      %s283 = smul.u32 16, %s18
      %v285 = vld [vmem:[%s275] sm:$0xf]
      %v286 = vld [vmem:[%s275 + $0x4] sm:$0xf]
      %v287 = vld [vmem:[%s275 + $0x8] sm:$0xf]
      %v288 = vld [vmem:[%s275 + $0xc] sm:$0xf]
      %v289 = vld [vmem:[%s275 + $0x10] sm:$0xf]
      %v290 = vld [vmem:[%s275 + $0x14] sm:$0xf]
      %v291 = vld [vmem:[%s275 + $0x18] sm:$0xf]
      %v292 = vld [vmem:[%s275 + $0x1c] sm:$0xf]
      %v293 = vld [vmem:[%s275 + $0x20] sm:$0xf]
      %v294 = vld [vmem:[%s275 + $0x24] sm:$0xf]
      %v295 = vld [vmem:[%s275 + $0x28] sm:$0xf]
      %v296 = vld [vmem:[%s275 + $0x2c] sm:$0xf]
      %v297 = vld [vmem:[%s275 + $0x30] sm:$0xf]
      %v298 = vld [vmem:[%s275 + $0x34] sm:$0xf]
      %v299 = vld [vmem:[%s275 + $0x38] sm:$0xf]
      %v300 = vld [vmem:[%s275 + $0x3c] sm:$0xf]
      %v301 = vld [vmem:[%s1] sm:$0xff]
      %v302 = vld [vmem:[%s1 + $0x8] sm:$0xff]
      %v303 = vld [vmem:[%s1 + $0x10] sm:$0xff]
      %v304 = vld [vmem:[%s1 + $0x18] sm:$0xff]
      %v305 = vld [vmem:[%s1 + $0x20] sm:$0xff]
      %v306 = vld [vmem:[%s1 + $0x28] sm:$0xff]
      %v307 = vld [vmem:[%s1 + $0x30] sm:$0xff]
      %v308 = vld [vmem:[%s1 + $0x38] sm:$0xff]
      %v309 = vld [vmem:[%s1 + $0x40] sm:$0xff]
      %v310 = vld [vmem:[%s1 + $0x48] sm:$0xff]
      %v311 = vld [vmem:[%s1 + $0x50] sm:$0xff]
      %v312 = vld [vmem:[%s1 + $0x58] sm:$0xff]
      %v313 = vld [vmem:[%s1 + $0x60] sm:$0xff]
      %v314 = vld [vmem:[%s1 + $0x68] sm:$0xff]
      %v315 = vld [vmem:[%s1 + $0x70] sm:$0xff]
      %v316 = vld [vmem:[%s1 + $0x78] sm:$0xff]
      %v317 = vld [vmem:[%s2] sm:$0x3]
      %v319 = vlaneseq
      %v320 = vshrl.u32 %v319, 7
      %v321 = vsub.s32 0, %v320
      %v322 = vrot.slane %v317, %v321
      %v323 = vlaneseq
      %v324 = vshrl.u32 %v323, 7
      %v325 = vsub.s32 1, %v324
      %v326 = vrot.slane %v317, %v325
      %v345 = vunpack.c.l.b16 %v285
      %v346 = vunpack.c.l.b16 %v286
      %v347 = vunpack.c.l.b16 %v287
      %v348 = vunpack.c.l.b16 %v288
      %v349 = vunpack.c.l.b16 %v289
      %v350 = vunpack.c.l.b16 %v290
      %v351 = vunpack.c.l.b16 %v291
      %v352 = vunpack.c.l.b16 %v292
      %v353 = vunpack.c.l.b16 %v293
      %v354 = vunpack.c.l.b16 %v294
      %v355 = vunpack.c.l.b16 %v295
      %v356 = vunpack.c.l.b16 %v296
      %v357 = vunpack.c.l.b16 %v297
      %v358 = vunpack.c.l.b16 %v298
      %v359 = vunpack.c.l.b16 %v299
      %v360 = vunpack.c.l.b16 %v300
      %v361 = vpack.c.b16 %v346, %v345
      %v362 = vpack.c.b16 %v348, %v347
      %v363 = vpack.c.b16 %v350, %v349
      %v364 = vpack.c.b16 %v352, %v351
      %v365 = vpack.c.b16 %v354, %v353
      %v366 = vpack.c.b16 %v356, %v355
      %v367 = vpack.c.b16 %v358, %v357
      %v368 = vpack.c.b16 %v360, %v359
      %v393 = vunpack.c.l.b16 %v301
      %v394 = vunpack.c.h.b16 %v301
      %v395 = vunpack.c.l.b16 %v302
      %v396 = vunpack.c.h.b16 %v302
      %v397 = vunpack.c.l.b16 %v303
      %v398 = vunpack.c.h.b16 %v303
      %v399 = vunpack.c.l.b16 %v304
      %v400 = vunpack.c.h.b16 %v304
      %v401 = vunpack.c.l.b16 %v305
      %v402 = vunpack.c.h.b16 %v305
      %v403 = vunpack.c.l.b16 %v306
      %v404 = vunpack.c.h.b16 %v306
      %v405 = vunpack.c.l.b16 %v307
      %v406 = vunpack.c.h.b16 %v307
      %v407 = vunpack.c.l.b16 %v308
      %v408 = vunpack.c.h.b16 %v308
      %v409 = vunpack.c.l.b16 %v309
      %v410 = vunpack.c.h.b16 %v309
      %v411 = vunpack.c.l.b16 %v310
      %v412 = vunpack.c.h.b16 %v310
      %v413 = vunpack.c.l.b16 %v311
      %v414 = vunpack.c.h.b16 %v311
      %v415 = vunpack.c.l.b16 %v312
      %v416 = vunpack.c.h.b16 %v312
      %v417 = vunpack.c.l.b16 %v313
      %v418 = vunpack.c.h.b16 %v313
      %v419 = vunpack.c.l.b16 %v314
      %v420 = vunpack.c.h.b16 %v314
      %v421 = vunpack.c.l.b16 %v315
      %v422 = vunpack.c.h.b16 %v315
      %v423 = vunpack.c.l.b16 %v316
      %v424 = vunpack.c.h.b16 %v316
      %v425 = vpack.c.b16 %v395, %v393
      %v426 = vpack.c.b16 %v396, %v394
      %v427 = vpack.c.b16 %v399, %v397
      %v428 = vpack.c.b16 %v400, %v398
      %v429 = vpack.c.b16 %v403, %v401
      %v430 = vpack.c.b16 %v404, %v402
      %v431 = vpack.c.b16 %v407, %v405
      %v432 = vpack.c.b16 %v408, %v406
      %v433 = vpack.c.b16 %v411, %v409
      %v434 = vpack.c.b16 %v412, %v410
      %v435 = vpack.c.b16 %v415, %v413
      %v436 = vpack.c.b16 %v416, %v414
      %v437 = vpack.c.b16 %v419, %v417
      %v438 = vpack.c.b16 %v420, %v418
      %v439 = vpack.c.b16 %v423, %v421
      %v440 = vpack.c.b16 %v424, %v422
      %457 = vmatprep.subr.bf16.mxu0 %v426
      %458 = vmatpush1.bf16.msra.mxu0 %v425
      %459 = vmatprep.subr.bf16.mxu0 %v428
      %460 = vmatpush1.bf16.msra.mxu0 %v427
      %461 = vmatprep.subr.bf16.mxu0 %v430
      %462 = vmatpush1.bf16.msra.mxu0 %v429
      %463 = vmatprep.subr.bf16.mxu0 %v432
      %464 = vmatpush1.bf16.msra.mxu0 %v431
      %465 = vmatprep.subr.bf16.mxu0 %v434
      %466 = vmatpush1.bf16.msra.mxu0 %v433
      %467 = vmatprep.subr.bf16.mxu0 %v436
      %468 = vmatpush1.bf16.msra.mxu0 %v435
      %469 = vmatprep.subr.bf16.mxu0 %v438
      %470 = vmatpush1.bf16.msra.mxu0 %v437
      %471 = vmatprep.subr.bf16.mxu0 %v440
      %472 = vmatpush1.bf16.msra.mxu0 %v439
      %473 = vmatprep.subr.bf16.mxu0 0
      %474 = vmatpush1.bf16.msra.mxu0 0
      %475 = vmatprep.subr.bf16.mxu0 0
      %476 = vmatpush1.bf16.msra.mxu0 0
      %477 = vmatprep.subr.bf16.mxu0 0
      %478 = vmatpush1.bf16.msra.mxu0 0
      %479 = vmatprep.subr.bf16.mxu0 0
      %480 = vmatpush1.bf16.msra.mxu0 0
      %481 = vmatprep.subr.bf16.mxu0 0
      %482 = vmatpush1.bf16.msra.mxu0 0
      %483 = vmatprep.subr.bf16.mxu0 0
      %484 = vmatpush1.bf16.msra.mxu0 0
      %485 = vmatprep.subr.bf16.mxu0 0
      %486 = vmatpush1.bf16.msra.mxu0 0
      %487 = vmatprep.subr.bf16.mxu0 0
      %488 = vmatpush1.bf16.msra.mxu0 0
      %489 = vmatprep.mubr.bf16.mxu0 0
      %490 = vmatmul.mubr.bf16.gmra.mrb[0].mxu0 %v361
      %v491 = vpop.f32.mrb[0].mxu0
      %v492 = vadd.f32 %v322, %v491
      %v493 = vpop.f32.mrb[0].mxu0
      %v494 = vadd.f32 %v326, %v493
      %v495 = vpop.f32.mrb[0].mxu0
      %v496 = vadd.f32 %v322, %v495
      %v497 = vpop.f32.mrb[0].mxu0
      %v498 = vadd.f32 %v326, %v497
      %499 = vmatprep.mubr.bf16.mxu0 0
      %500 = vmatmul.mubr.bf16.gmra.mrb[0].mxu0 %v362
      %v501 = vpop.f32.mrb[0].mxu0
      %v502 = vadd.f32 %v322, %v501
      %v503 = vpop.f32.mrb[0].mxu0
      %v504 = vadd.f32 %v326, %v503
      %v505 = vpop.f32.mrb[0].mxu0
      %v506 = vadd.f32 %v322, %v505
      %v507 = vpop.f32.mrb[0].mxu0
      %v508 = vadd.f32 %v326, %v507
      %509 = vmatprep.mubr.bf16.mxu0 0
      %510 = vmatmul.mubr.bf16.gmra.mrb[0].mxu0 %v363
      %v511 = vpop.f32.mrb[0].mxu0
      %v512 = vadd.f32 %v322, %v511
      %v513 = vpop.f32.mrb[0].mxu0
      %v514 = vadd.f32 %v326, %v513
      %v515 = vpop.f32.mrb[0].mxu0
      %v516 = vadd.f32 %v322, %v515
      %v517 = vpop.f32.mrb[0].mxu0
      %v518 = vadd.f32 %v326, %v517
      %519 = vmatprep.mubr.bf16.mxu0 0
      %520 = vmatmul.mubr.bf16.gmra.mrb[0].mxu0 %v364
      %v521 = vpop.f32.mrb[0].mxu0
      %v522 = vadd.f32 %v322, %v521
      %v523 = vpop.f32.mrb[0].mxu0
      %v524 = vadd.f32 %v326, %v523
      %v525 = vpop.f32.mrb[0].mxu0
      %v526 = vadd.f32 %v322, %v525
      %v527 = vpop.f32.mrb[0].mxu0
      %v528 = vadd.f32 %v326, %v527
      %529 = vmatprep.mubr.bf16.mxu0 0
      %530 = vmatmul.mubr.bf16.gmra.mrb[0].mxu0 %v365
      %v531 = vpop.f32.mrb[0].mxu0
      %v532 = vadd.f32 %v322, %v531
      %v533 = vpop.f32.mrb[0].mxu0
      %v534 = vadd.f32 %v326, %v533
      %v535 = vpop.f32.mrb[0].mxu0
      %v536 = vadd.f32 %v322, %v535
      %v537 = vpop.f32.mrb[0].mxu0
      %v538 = vadd.f32 %v326, %v537
      %539 = vmatprep.mubr.bf16.mxu0 0
      %540 = vmatmul.mubr.bf16.gmra.mrb[0].mxu0 %v366
      %v541 = vpop.f32.mrb[0].mxu0
      %v542 = vadd.f32 %v322, %v541
      %v543 = vpop.f32.mrb[0].mxu0
      %v544 = vadd.f32 %v326, %v543
      %v545 = vpop.f32.mrb[0].mxu0
      %v546 = vadd.f32 %v322, %v545
      %v547 = vpop.f32.mrb[0].mxu0
      %v548 = vadd.f32 %v326, %v547
      %549 = vmatprep.mubr.bf16.mxu0 0
      %550 = vmatmul.mubr.bf16.gmra.mrb[0].mxu0 %v367
      %v551 = vpop.f32.mrb[0].mxu0
      %v552 = vadd.f32 %v322, %v551
      %v553 = vpop.f32.mrb[0].mxu0
      %v554 = vadd.f32 %v326, %v553
      %v555 = vpop.f32.mrb[0].mxu0
      %v556 = vadd.f32 %v322, %v555
      %v557 = vpop.f32.mrb[0].mxu0
      %v558 = vadd.f32 %v326, %v557
      %559 = vmatprep.mubr.bf16.mxu0 0
      %560 = vmatmul.mubr.bf16.gmra.mrb[0].mxu0 %v368
      %v561 = vpop.f32.mrb[0].mxu0
      %v562 = vadd.f32 %v322, %v561
      %v563 = vpop.f32.mrb[0].mxu0
      %v564 = vadd.f32 %v326, %v563
      %v565 = vpop.f32.mrb[0].mxu0
      %v566 = vadd.f32 %v322, %v565
      %v567 = vpop.f32.mrb[0].mxu0
      %v568 = vadd.f32 %v326, %v567
      %569 = vdwg.mxu0
      %vm570 = vcmp.gt.f32.partialorder %v492, 0.0
      %vm571 = vcmp.gt.f32.partialorder %v494, 0.0
      %vm572 = vcmp.gt.f32.partialorder %v496, 0.0
      %vm573 = vcmp.gt.f32.partialorder %v498, 0.0
      %vm574 = vcmp.gt.f32.partialorder %v502, 0.0
      %vm575 = vcmp.gt.f32.partialorder %v504, 0.0
      %vm576 = vcmp.gt.f32.partialorder %v506, 0.0
      %vm577 = vcmp.gt.f32.partialorder %v508, 0.0
      %vm578 = vcmp.gt.f32.partialorder %v512, 0.0
      %vm579 = vcmp.gt.f32.partialorder %v514, 0.0
      %vm580 = vcmp.gt.f32.partialorder %v516, 0.0
      %vm581 = vcmp.gt.f32.partialorder %v518, 0.0
      %vm582 = vcmp.gt.f32.partialorder %v522, 0.0
      %vm583 = vcmp.gt.f32.partialorder %v524, 0.0
      %vm584 = vcmp.gt.f32.partialorder %v526, 0.0
      %vm585 = vcmp.gt.f32.partialorder %v528, 0.0
      %vm586 = vcmp.gt.f32.partialorder %v532, 0.0
      %vm587 = vcmp.gt.f32.partialorder %v534, 0.0
      %vm588 = vcmp.gt.f32.partialorder %v536, 0.0
      %vm589 = vcmp.gt.f32.partialorder %v538, 0.0
      %vm590 = vcmp.gt.f32.partialorder %v542, 0.0
      %vm591 = vcmp.gt.f32.partialorder %v544, 0.0
      %vm592 = vcmp.gt.f32.partialorder %v546, 0.0
      %vm593 = vcmp.gt.f32.partialorder %v548, 0.0
      %vm594 = vcmp.gt.f32.partialorder %v552, 0.0
      %vm595 = vcmp.gt.f32.partialorder %v554, 0.0
      %vm596 = vcmp.gt.f32.partialorder %v556, 0.0
      %vm597 = vcmp.gt.f32.partialorder %v558, 0.0
      %vm598 = vcmp.gt.f32.partialorder %v562, 0.0
      %vm599 = vcmp.gt.f32.partialorder %v564, 0.0
      %vm600 = vcmp.gt.f32.partialorder %v566, 0.0
      %vm601 = vcmp.gt.f32.partialorder %v568, 0.0
      %v602 = vmul.f32 %v492, 0.02
      %v603 = vmul.f32 %v494, 0.02
      %v604 = vmul.f32 %v496, 0.02
      %v605 = vmul.f32 %v498, 0.02
      %v606 = vmul.f32 %v502, 0.02
      %v607 = vmul.f32 %v504, 0.02
      %v608 = vmul.f32 %v506, 0.02
      %v609 = vmul.f32 %v508, 0.02
      %v610 = vmul.f32 %v512, 0.02
      %v611 = vmul.f32 %v514, 0.02
      %v612 = vmul.f32 %v516, 0.02
      %v613 = vmul.f32 %v518, 0.02
      %v614 = vmul.f32 %v522, 0.02
      %v615 = vmul.f32 %v524, 0.02
      %v616 = vmul.f32 %v526, 0.02
      %v617 = vmul.f32 %v528, 0.02
      %v618 = vmul.f32 %v532, 0.02
      %v619 = vmul.f32 %v534, 0.02
      %v620 = vmul.f32 %v536, 0.02
      %v621 = vmul.f32 %v538, 0.02
      %v622 = vmul.f32 %v542, 0.02
      %v623 = vmul.f32 %v544, 0.02
      %v624 = vmul.f32 %v546, 0.02
      %v625 = vmul.f32 %v548, 0.02
      %v626 = vmul.f32 %v552, 0.02
      %v627 = vmul.f32 %v554, 0.02
      %v628 = vmul.f32 %v556, 0.02
      %v629 = vmul.f32 %v558, 0.02
      %v630 = vmul.f32 %v562, 0.02
      %v631 = vmul.f32 %v564, 0.02
      %v632 = vmul.f32 %v566, 0.02
      %v633 = vmul.f32 %v568, 0.02
      %v634 = vsel %vm570, %v492, %v602
      %v635 = vsel %vm571, %v494, %v603
      %v636 = vsel %vm572, %v496, %v604
      %v637 = vsel %vm573, %v498, %v605
      %v638 = vsel %vm574, %v502, %v606
      %v639 = vsel %vm575, %v504, %v607
      %v640 = vsel %vm576, %v506, %v608
      %v641 = vsel %vm577, %v508, %v609
      %v642 = vsel %vm578, %v512, %v610
      %v643 = vsel %vm579, %v514, %v611
      %v644 = vsel %vm580, %v516, %v612
      %v645 = vsel %vm581, %v518, %v613
      %v646 = vsel %vm582, %v522, %v614
      %v647 = vsel %vm583, %v524, %v615
      %v648 = vsel %vm584, %v526, %v616
      %v649 = vsel %vm585, %v528, %v617
      %v650 = vsel %vm586, %v532, %v618
      %v651 = vsel %vm587, %v534, %v619
      %v652 = vsel %vm588, %v536, %v620
      %v653 = vsel %vm589, %v538, %v621
      %v654 = vsel %vm590, %v542, %v622
      %v655 = vsel %vm591, %v544, %v623
      %v656 = vsel %vm592, %v546, %v624
      %v657 = vsel %vm593, %v548, %v625
      %v658 = vsel %vm594, %v552, %v626
      %v659 = vsel %vm595, %v554, %v627
      %v660 = vsel %vm596, %v556, %v628
      %v661 = vsel %vm597, %v558, %v629
      %v662 = vsel %vm598, %v562, %v630
      %v663 = vsel %vm599, %v564, %v631
      %v664 = vsel %vm600, %v566, %v632
      %v665 = vsel %vm601, %v568, %v633
      %vm666 = vcmask 588800
      %v667 = vsel %vm666, %v635, 0.0
      %v668 = vadd.f32 %v634, %v667
      %669 = vadd.xlane.f32.xlu0 %v668
      %v670 = vpop.xlane.xlu0 %669
      %v671 = vsel %vm666, %v637, 0.0
      %v672 = vadd.f32 %v636, %v671
      %673 = vadd.xlane.f32.xlu0 %v672
      %v674 = vpop.xlane.xlu0 %673
      %v675 = vsel %vm666, %v639, 0.0
      %v676 = vadd.f32 %v638, %v675
      %677 = vadd.xlane.f32.xlu0 %v676
      %v678 = vpop.xlane.xlu0 %677
      %v679 = vsel %vm666, %v641, 0.0
      %v680 = vadd.f32 %v640, %v679
      %681 = vadd.xlane.f32.xlu0 %v680
      %v682 = vpop.xlane.xlu0 %681
      %v683 = vsel %vm666, %v643, 0.0
      %v684 = vadd.f32 %v642, %v683
      %685 = vadd.xlane.f32.xlu0 %v684
      %v686 = vpop.xlane.xlu0 %685
      %v687 = vsel %vm666, %v645, 0.0
      %v688 = vadd.f32 %v644, %v687
      %689 = vadd.xlane.f32.xlu0 %v688
      %v690 = vpop.xlane.xlu0 %689
      %v691 = vsel %vm666, %v647, 0.0
      %v692 = vadd.f32 %v646, %v691
      %693 = vadd.xlane.f32.xlu0 %v692
      %v694 = vpop.xlane.xlu0 %693
      %v695 = vsel %vm666, %v649, 0.0
      %v696 = vadd.f32 %v648, %v695
      %697 = vadd.xlane.f32.xlu0 %v696
      %v698 = vpop.xlane.xlu0 %697
      %v699 = vsel %vm666, %v651, 0.0
      %v700 = vadd.f32 %v650, %v699
      %701 = vadd.xlane.f32.xlu0 %v700
      %v702 = vpop.xlane.xlu0 %701
      %v703 = vsel %vm666, %v653, 0.0
      %v704 = vadd.f32 %v652, %v703
      %705 = vadd.xlane.f32.xlu0 %v704
      %v706 = vpop.xlane.xlu0 %705
      %v707 = vsel %vm666, %v655, 0.0
      %v708 = vadd.f32 %v654, %v707
      %709 = vadd.xlane.f32.xlu0 %v708
      %v710 = vpop.xlane.xlu0 %709
      %v711 = vsel %vm666, %v657, 0.0
      %v712 = vadd.f32 %v656, %v711
      %713 = vadd.xlane.f32.xlu0 %v712
      %v714 = vpop.xlane.xlu0 %713
      %v715 = vsel %vm666, %v659, 0.0
      %v716 = vadd.f32 %v658, %v715
      %717 = vadd.xlane.f32.xlu0 %v716
      %v718 = vpop.xlane.xlu0 %717
      %v719 = vsel %vm666, %v661, 0.0
      %v720 = vadd.f32 %v660, %v719
      %721 = vadd.xlane.f32.xlu0 %v720
      %v722 = vpop.xlane.xlu0 %721
      %v723 = vsel %vm666, %v663, 0.0
      %v724 = vadd.f32 %v662, %v723
      %725 = vadd.xlane.f32.xlu0 %v724
      %v726 = vpop.xlane.xlu0 %725
      %v727 = vsel %vm666, %v665, 0.0
      %v728 = vadd.f32 %v664, %v727
      %729 = vadd.xlane.f32.xlu0 %v728
      %v730 = vpop.xlane.xlu0 %729
      %v731 = vrcp.pop 200.0
      %v732 = vmul.f32 %v670, %v731
      %v733 = vmul.f32 %v674, %v731
      %v734 = vmul.f32 %v678, %v731
      %v735 = vmul.f32 %v682, %v731
      %v736 = vmul.f32 %v686, %v731
      %v737 = vmul.f32 %v690, %v731
      %v738 = vmul.f32 %v694, %v731
      %v739 = vmul.f32 %v698, %v731
      %v740 = vmul.f32 %v702, %v731
      %v741 = vmul.f32 %v706, %v731
      %v742 = vmul.f32 %v710, %v731
      %v743 = vmul.f32 %v714, %v731
      %v744 = vmul.f32 %v718, %v731
      %v745 = vmul.f32 %v722, %v731
      %v746 = vmul.f32 %v726, %v731
      %v747 = vmul.f32 %v730, %v731
      %v748 = vsub.f32 %v634, %v732
      %v749 = vsub.f32 %v635, %v732
      %v750 = vsub.f32 %v636, %v733
      %v751 = vsub.f32 %v637, %v733
      %v752 = vsub.f32 %v638, %v734
      %v753 = vsub.f32 %v639, %v734
      %v754 = vsub.f32 %v640, %v735
      %v755 = vsub.f32 %v641, %v735
      %v756 = vsub.f32 %v642, %v736
      %v757 = vsub.f32 %v643, %v736
      %v758 = vsub.f32 %v644, %v737
      %v759 = vsub.f32 %v645, %v737
      %v760 = vsub.f32 %v646, %v738
      %v761 = vsub.f32 %v647, %v738
      %v762 = vsub.f32 %v648, %v739
      %v763 = vsub.f32 %v649, %v739
      %v764 = vsub.f32 %v650, %v740
      %v765 = vsub.f32 %v651, %v740
      %v766 = vsub.f32 %v652, %v741
      %v767 = vsub.f32 %v653, %v741
      %v768 = vsub.f32 %v654, %v742
      %v769 = vsub.f32 %v655, %v742
      %v770 = vsub.f32 %v656, %v743
      %v771 = vsub.f32 %v657, %v743
      %v772 = vsub.f32 %v658, %v744
      %v773 = vsub.f32 %v659, %v744
      %v774 = vsub.f32 %v660, %v745
      %v775 = vsub.f32 %v661, %v745
      %v776 = vsub.f32 %v662, %v746
      %v777 = vsub.f32 %v663, %v746
      %v778 = vsub.f32 %v664, %v747
      %v779 = vsub.f32 %v665, %v747
      %v780 = vmul.f32 %v748, %v748
      %v781 = vmul.f32 %v749, %v749
      %v782 = vmul.f32 %v750, %v750
      %v783 = vmul.f32 %v751, %v751
      %v784 = vmul.f32 %v752, %v752
      %v785 = vmul.f32 %v753, %v753
      %v786 = vmul.f32 %v754, %v754
      %v787 = vmul.f32 %v755, %v755
      %v788 = vmul.f32 %v756, %v756
      %v789 = vmul.f32 %v757, %v757
      %v790 = vmul.f32 %v758, %v758
      %v791 = vmul.f32 %v759, %v759
      %v792 = vmul.f32 %v760, %v760
      %v793 = vmul.f32 %v761, %v761
      %v794 = vmul.f32 %v762, %v762
      %v795 = vmul.f32 %v763, %v763
      %v796 = vmul.f32 %v764, %v764
      %v797 = vmul.f32 %v765, %v765
      %v798 = vmul.f32 %v766, %v766
      %v799 = vmul.f32 %v767, %v767
      %v800 = vmul.f32 %v768, %v768
      %v801 = vmul.f32 %v769, %v769
      %v802 = vmul.f32 %v770, %v770
      %v803 = vmul.f32 %v771, %v771
      %v804 = vmul.f32 %v772, %v772
      %v805 = vmul.f32 %v773, %v773
      %v806 = vmul.f32 %v774, %v774
      %v807 = vmul.f32 %v775, %v775
      %v808 = vmul.f32 %v776, %v776
      %v809 = vmul.f32 %v777, %v777
      %v810 = vmul.f32 %v778, %v778
      %v811 = vmul.f32 %v779, %v779
      %v812 = vsel %vm666, %v781, 0.0
      %v813 = vadd.f32 %v780, %v812
      %814 = vadd.xlane.f32.xlu0 %v813
      %v815 = vpop.xlane.xlu0 %814
      %v816 = vsel %vm666, %v783, 0.0
      %v817 = vadd.f32 %v782, %v816
      %818 = vadd.xlane.f32.xlu0 %v817
      %v819 = vpop.xlane.xlu0 %818
      %v820 = vsel %vm666, %v785, 0.0
      %v821 = vadd.f32 %v784, %v820
      %822 = vadd.xlane.f32.xlu0 %v821
      %v823 = vpop.xlane.xlu0 %822
      %v824 = vsel %vm666, %v787, 0.0
      %v825 = vadd.f32 %v786, %v824
      %826 = vadd.xlane.f32.xlu0 %v825
      %v827 = vpop.xlane.xlu0 %826
      %v828 = vsel %vm666, %v789, 0.0
      %v829 = vadd.f32 %v788, %v828
      %830 = vadd.xlane.f32.xlu0 %v829
      %v831 = vpop.xlane.xlu0 %830
      %v832 = vsel %vm666, %v791, 0.0
      %v833 = vadd.f32 %v790, %v832
      %834 = vadd.xlane.f32.xlu0 %v833
      %v835 = vpop.xlane.xlu0 %834
      %v836 = vsel %vm666, %v793, 0.0
      %v837 = vadd.f32 %v792, %v836
      %838 = vadd.xlane.f32.xlu0 %v837
      %v839 = vpop.xlane.xlu0 %838
      %v840 = vsel %vm666, %v795, 0.0
      %v841 = vadd.f32 %v794, %v840
      %842 = vadd.xlane.f32.xlu0 %v841
      %v843 = vpop.xlane.xlu0 %842
      %v844 = vsel %vm666, %v797, 0.0
      %v845 = vadd.f32 %v796, %v844
      %846 = vadd.xlane.f32.xlu0 %v845
      %v847 = vpop.xlane.xlu0 %846
      %v848 = vsel %vm666, %v799, 0.0
      %v849 = vadd.f32 %v798, %v848
      %850 = vadd.xlane.f32.xlu0 %v849
      %v851 = vpop.xlane.xlu0 %850
      %v852 = vsel %vm666, %v801, 0.0
      %v853 = vadd.f32 %v800, %v852
      %854 = vadd.xlane.f32.xlu0 %v853
      %v855 = vpop.xlane.xlu0 %854
      %v856 = vsel %vm666, %v803, 0.0
      %v857 = vadd.f32 %v802, %v856
      %858 = vadd.xlane.f32.xlu0 %v857
      %v859 = vpop.xlane.xlu0 %858
      %v860 = vsel %vm666, %v805, 0.0
      %v861 = vadd.f32 %v804, %v860
      %862 = vadd.xlane.f32.xlu0 %v861
      %v863 = vpop.xlane.xlu0 %862
      %v864 = vsel %vm666, %v807, 0.0
      %v865 = vadd.f32 %v806, %v864
      %866 = vadd.xlane.f32.xlu0 %v865
      %v867 = vpop.xlane.xlu0 %866
      %v868 = vsel %vm666, %v809, 0.0
      %v869 = vadd.f32 %v808, %v868
      %870 = vadd.xlane.f32.xlu0 %v869
      %v871 = vpop.xlane.xlu0 %870
      %v872 = vsel %vm666, %v811, 0.0
      %v873 = vadd.f32 %v810, %v872
      %874 = vadd.xlane.f32.xlu0 %v873
      %v875 = vpop.xlane.xlu0 %874
      %v876 = vmul.f32 %v815, %v731
      %v877 = vmul.f32 %v819, %v731
      %v878 = vmul.f32 %v823, %v731
      %v879 = vmul.f32 %v827, %v731
      %v880 = vmul.f32 %v831, %v731
      %v881 = vmul.f32 %v835, %v731
      %v882 = vmul.f32 %v839, %v731
      %v883 = vmul.f32 %v843, %v731
      %v884 = vmul.f32 %v847, %v731
      %v885 = vmul.f32 %v851, %v731
      %v886 = vmul.f32 %v855, %v731
      %v887 = vmul.f32 %v859, %v731
      %v888 = vmul.f32 %v863, %v731
      %v889 = vmul.f32 %v867, %v731
      %v890 = vmul.f32 %v871, %v731
      %v891 = vmul.f32 %v875, %v731
      %v892 = vadd.f32 %v876, 1e-05
      %v893 = vadd.f32 %v877, 1e-05
      %v894 = vadd.f32 %v878, 1e-05
      %v895 = vadd.f32 %v879, 1e-05
      %v896 = vadd.f32 %v880, 1e-05
      %v897 = vadd.f32 %v881, 1e-05
      %v898 = vadd.f32 %v882, 1e-05
      %v899 = vadd.f32 %v883, 1e-05
      %v900 = vadd.f32 %v884, 1e-05
      %v901 = vadd.f32 %v885, 1e-05
      %v902 = vadd.f32 %v886, 1e-05
      %v903 = vadd.f32 %v887, 1e-05
      %v904 = vadd.f32 %v888, 1e-05
      %v905 = vadd.f32 %v889, 1e-05
      %v906 = vadd.f32 %v890, 1e-05
      %v907 = vadd.f32 %v891, 1e-05
      %v908 = vrsqrt.pop %v892
      %v909 = vrsqrt.pop %v893
      %v910 = vrsqrt.pop %v894
      %v911 = vrsqrt.pop %v895
      %v912 = vrsqrt.pop %v896
      %v913 = vrsqrt.pop %v897
      %v914 = vrsqrt.pop %v898
      %v915 = vrsqrt.pop %v899
      %v916 = vrsqrt.pop %v900
      %v917 = vrsqrt.pop %v901
      %v918 = vrsqrt.pop %v902
      %v919 = vrsqrt.pop %v903
      %v920 = vrsqrt.pop %v904
      %v921 = vrsqrt.pop %v905
      %v922 = vrsqrt.pop %v906
      %v923 = vrsqrt.pop %v907
      %v924 = vmul.f32 %v748, %v908
      %v925 = vmul.f32 %v749, %v908
      %v926 = vmul.f32 %v750, %v909
      %v927 = vmul.f32 %v751, %v909
      %v928 = vmul.f32 %v752, %v910
      %v929 = vmul.f32 %v753, %v910
      %v930 = vmul.f32 %v754, %v911
      %v931 = vmul.f32 %v755, %v911
      %v932 = vmul.f32 %v756, %v912
      %v933 = vmul.f32 %v757, %v912
      %v934 = vmul.f32 %v758, %v913
      %v935 = vmul.f32 %v759, %v913
      %v936 = vmul.f32 %v760, %v914
      %v937 = vmul.f32 %v761, %v914
      %v938 = vmul.f32 %v762, %v915
      %v939 = vmul.f32 %v763, %v915
      %v940 = vmul.f32 %v764, %v916
      %v941 = vmul.f32 %v765, %v916
      %v942 = vmul.f32 %v766, %v917
      %v943 = vmul.f32 %v767, %v917
      %v944 = vmul.f32 %v768, %v918
      %v945 = vmul.f32 %v769, %v918
      %v946 = vmul.f32 %v770, %v919
      %v947 = vmul.f32 %v771, %v919
      %v948 = vmul.f32 %v772, %v920
      %v949 = vmul.f32 %v773, %v920
      %v950 = vmul.f32 %v774, %v921
      %v951 = vmul.f32 %v775, %v921
      %v952 = vmul.f32 %v776, %v922
      %v953 = vmul.f32 %v777, %v922
      %v954 = vmul.f32 %v778, %v923
      %v955 = vmul.f32 %v779, %v923
      %v956 = vld [vmem:[%s3] sm:$0x3]
      %v958 = vlaneseq
      %v959 = vshrl.u32 %v958, 7
      %v960 = vsub.s32 0, %v959
      %v961 = vrot.slane %v956, %v960
      %v962 = vlaneseq
      %v963 = vshrl.u32 %v962, 7
      %v964 = vsub.s32 1, %v963
      %v965 = vrot.slane %v956, %v964
      %v968 = vmul.f32 %v924, %v961
      %v969 = vmul.f32 %v925, %v965
      %v970 = vmul.f32 %v926, %v961
      %v971 = vmul.f32 %v927, %v965
      %v972 = vmul.f32 %v928, %v961
      %v973 = vmul.f32 %v929, %v965
      %v974 = vmul.f32 %v930, %v961
      %v975 = vmul.f32 %v931, %v965
      %v976 = vmul.f32 %v932, %v961
      %v977 = vmul.f32 %v933, %v965
      %v978 = vmul.f32 %v934, %v961
      %v979 = vmul.f32 %v935, %v965
      %v980 = vmul.f32 %v936, %v961
      %v981 = vmul.f32 %v937, %v965
      %v982 = vmul.f32 %v938, %v961
      %v983 = vmul.f32 %v939, %v965
      %v984 = vmul.f32 %v940, %v961
      %v985 = vmul.f32 %v941, %v965
      %v986 = vmul.f32 %v942, %v961
      %v987 = vmul.f32 %v943, %v965
      %v988 = vmul.f32 %v944, %v961
      %v989 = vmul.f32 %v945, %v965
      %v990 = vmul.f32 %v946, %v961
      %v991 = vmul.f32 %v947, %v965
      %v992 = vmul.f32 %v948, %v961
      %v993 = vmul.f32 %v949, %v965
      %v994 = vmul.f32 %v950, %v961
      %v995 = vmul.f32 %v951, %v965
      %v996 = vmul.f32 %v952, %v961
      %v997 = vmul.f32 %v953, %v965
      %v998 = vmul.f32 %v954, %v961
      %v999 = vmul.f32 %v955, %v965
      %v1000 = vld [vmem:[%s4] sm:$0x3]
      %v1002 = vlaneseq
      %v1003 = vshrl.u32 %v1002, 7
      %v1004 = vsub.s32 0, %v1003
      %v1005 = vrot.slane %v1000, %v1004
      %v1006 = vlaneseq
      %v1007 = vshrl.u32 %v1006, 7
      %v1008 = vsub.s32 1, %v1007
      %v1009 = vrot.slane %v1000, %v1008
      %v1012 = vadd.f32 %v968, %v1005
      %v1013 = vadd.f32 %v969, %v1009
      %v1014 = vadd.f32 %v970, %v1005
      %v1015 = vadd.f32 %v971, %v1009
      %v1016 = vadd.f32 %v972, %v1005
      %v1017 = vadd.f32 %v973, %v1009
      %v1018 = vadd.f32 %v974, %v1005
      %v1019 = vadd.f32 %v975, %v1009
      %v1020 = vadd.f32 %v976, %v1005
      %v1021 = vadd.f32 %v977, %v1009
      %v1022 = vadd.f32 %v978, %v1005
      %v1023 = vadd.f32 %v979, %v1009
      %v1024 = vadd.f32 %v980, %v1005
      %v1025 = vadd.f32 %v981, %v1009
      %v1026 = vadd.f32 %v982, %v1005
      %v1027 = vadd.f32 %v983, %v1009
      %v1028 = vadd.f32 %v984, %v1005
      %v1029 = vadd.f32 %v985, %v1009
      %v1030 = vadd.f32 %v986, %v1005
      %v1031 = vadd.f32 %v987, %v1009
      %v1032 = vadd.f32 %v988, %v1005
      %v1033 = vadd.f32 %v989, %v1009
      %v1034 = vadd.f32 %v990, %v1005
      %v1035 = vadd.f32 %v991, %v1009
      %v1036 = vadd.f32 %v992, %v1005
      %v1037 = vadd.f32 %v993, %v1009
      %v1038 = vadd.f32 %v994, %v1005
      %v1039 = vadd.f32 %v995, %v1009
      %v1040 = vadd.f32 %v996, %v1005
      %v1041 = vadd.f32 %v997, %v1009
      %v1042 = vadd.f32 %v998, %v1005
      %v1043 = vadd.f32 %v999, %v1009
      %v1044 = vpack.c.bf16 %v1014, %v1012
      %v1045 = vpack.c.bf16 %v1015, %v1013
      %v1046 = vpack.c.bf16 %v1018, %v1016
      %v1047 = vpack.c.bf16 %v1019, %v1017
      %v1048 = vpack.c.bf16 %v1022, %v1020
      %v1049 = vpack.c.bf16 %v1023, %v1021
      %v1050 = vpack.c.bf16 %v1026, %v1024
      %v1051 = vpack.c.bf16 %v1027, %v1025
      %v1052 = vpack.c.bf16 %v1030, %v1028
      %v1053 = vpack.c.bf16 %v1031, %v1029
      %v1054 = vpack.c.bf16 %v1034, %v1032
      %v1055 = vpack.c.bf16 %v1035, %v1033
      %v1056 = vpack.c.bf16 %v1038, %v1036
      %v1057 = vpack.c.bf16 %v1039, %v1037
      %v1058 = vpack.c.bf16 %v1042, %v1040
      %v1059 = vpack.c.bf16 %v1043, %v1041
      %v1060 = vld [vmem:[%s5] sm:$0xff]
      %v1061 = vld [vmem:[%s5 + $0x8] sm:$0xff]
      %v1062 = vld [vmem:[%s5 + $0x10] sm:$0xff]
      %v1063 = vld [vmem:[%s5 + $0x18] sm:$0xf]
      %v1064 = vld [vmem:[%s5 + $0x1c] sm:$0xff]
      %v1065 = vld [vmem:[%s5 + $0x24] sm:$0xff]
      %v1066 = vld [vmem:[%s5 + $0x2c] sm:$0xff]
      %v1067 = vld [vmem:[%s5 + $0x34] sm:$0xf]
      %v1068 = vld [vmem:[%s5 + $0x38] sm:$0xff]
      %v1069 = vld [vmem:[%s5 + $0x40] sm:$0xff]
      %v1070 = vld [vmem:[%s5 + $0x48] sm:$0xff]
      %v1071 = vld [vmem:[%s5 + $0x50] sm:$0xf]
      %v1072 = vld [vmem:[%s5 + $0x54] sm:$0xff]
      %v1073 = vld [vmem:[%s5 + $0x5c] sm:$0xff]
      %v1074 = vld [vmem:[%s5 + $0x64] sm:$0xff]
      %v1075 = vld [vmem:[%s5 + $0x6c] sm:$0xf]
      %v1076 = vld [vmem:[%s5 + $0x70] sm:$0xff]
      %v1077 = vld [vmem:[%s5 + $0x78] sm:$0xff]
      %v1078 = vld [vmem:[%s5 + $0x80] sm:$0xff]
      %v1079 = vld [vmem:[%s5 + $0x88] sm:$0xf]
      %v1080 = vld [vmem:[%s5 + $0x8c] sm:$0xff]
      %v1081 = vld [vmem:[%s5 + $0x94] sm:$0xff]
      %v1082 = vld [vmem:[%s5 + $0x9c] sm:$0xff]
      %v1083 = vld [vmem:[%s5 + $0xa4] sm:$0xf]
      %v1084 = vld [vmem:[%s5 + $0xa8] sm:$0xff]
      %v1085 = vld [vmem:[%s5 + $0xb0] sm:$0xff]
      %v1086 = vld [vmem:[%s5 + $0xb8] sm:$0xff]
      %v1087 = vld [vmem:[%s5 + $0xc0] sm:$0xf]
      %v1088 = vld [vmem:[%s5 + $0xc4] sm:$0xff]
      %v1089 = vld [vmem:[%s5 + $0xcc] sm:$0xff]
      %v1090 = vld [vmem:[%s5 + $0xd4] sm:$0xff]
      %v1091 = vld [vmem:[%s5 + $0xdc] sm:$0xf]
      %v1092 = vld [vmem:[%s5 + $0xe0] sm:$0xff]
      %v1093 = vld [vmem:[%s5 + $0xe8] sm:$0xff]
      %v1094 = vld [vmem:[%s5 + $0xf0] sm:$0xff]
      %v1095 = vld [vmem:[%s5 + $0xf8] sm:$0xf]
      %v1096 = vld [vmem:[%s5 + $0xfc] sm:$0xff]
      %v1097 = vld [vmem:[%s5 + $0x104] sm:$0xff]
      %v1098 = vld [vmem:[%s5 + $0x10c] sm:$0xff]
      %v1099 = vld [vmem:[%s5 + $0x114] sm:$0xf]
      %v1100 = vld [vmem:[%s5 + $0x118] sm:$0xff]
      %v1101 = vld [vmem:[%s5 + $0x120] sm:$0xff]
      %v1102 = vld [vmem:[%s5 + $0x128] sm:$0xff]
      %v1103 = vld [vmem:[%s5 + $0x130] sm:$0xf]
      %v1104 = vld [vmem:[%s5 + $0x134] sm:$0xff]
      %v1105 = vld [vmem:[%s5 + $0x13c] sm:$0xff]
      %v1106 = vld [vmem:[%s5 + $0x144] sm:$0xff]
      %v1107 = vld [vmem:[%s5 + $0x14c] sm:$0xf]
      %v1108 = vld [vmem:[%s5 + $0x150] sm:$0xff]
      %v1109 = vld [vmem:[%s5 + $0x158] sm:$0xff]
      %v1110 = vld [vmem:[%s5 + $0x160] sm:$0xff]
      %v1111 = vld [vmem:[%s5 + $0x168] sm:$0xf]
      %v1112 = vld [vmem:[%s5 + $0x16c] sm:$0xff]
      %v1113 = vld [vmem:[%s5 + $0x174] sm:$0xff]
      %v1114 = vld [vmem:[%s5 + $0x17c] sm:$0xff]
      %v1115 = vld [vmem:[%s5 + $0x184] sm:$0xf]
      %v1116 = vld [vmem:[%s5 + $0x188] sm:$0xff]
      %v1117 = vld [vmem:[%s5 + $0x190] sm:$0xff]
      %v1118 = vld [vmem:[%s5 + $0x198] sm:$0xff]
      %v1119 = vld [vmem:[%s5 + $0x1a0] sm:$0xf]
      %v1120 = vld [vmem:[%s5 + $0x1a4] sm:$0xff]
      %v1121 = vld [vmem:[%s5 + $0x1ac] sm:$0xff]
      %v1122 = vld [vmem:[%s5 + $0x1b4] sm:$0xff]
      %v1123 = vld [vmem:[%s5 + $0x1bc] sm:$0xf]
      %v1124 = vld [vmem:[%s5 + $0x1c0] sm:$0xff]
      %v1125 = vld [vmem:[%s5 + $0x1c8] sm:$0xff]
      %v1126 = vld [vmem:[%s5 + $0x1d0] sm:$0xff]
      %v1127 = vld [vmem:[%s5 + $0x1d8] sm:$0xf]
      %v1128 = vld [vmem:[%s5 + $0x1dc] sm:$0xff]
      %v1129 = vld [vmem:[%s5 + $0x1e4] sm:$0xff]
      %v1130 = vld [vmem:[%s5 + $0x1ec] sm:$0xff]
      %v1131 = vld [vmem:[%s5 + $0x1f4] sm:$0xf]
      %v1132 = vld [vmem:[%s5 + $0x1f8] sm:$0xff]
      %v1133 = vld [vmem:[%s5 + $0x200] sm:$0xff]
      %v1134 = vld [vmem:[%s5 + $0x208] sm:$0xff]
      %v1135 = vld [vmem:[%s5 + $0x210] sm:$0xf]
      %v1136 = vld [vmem:[%s5 + $0x214] sm:$0xff]
      %v1137 = vld [vmem:[%s5 + $0x21c] sm:$0xff]
      %v1138 = vld [vmem:[%s5 + $0x224] sm:$0xff]
      %v1139 = vld [vmem:[%s5 + $0x22c] sm:$0xf]
      %v1140 = vld [vmem:[%s5 + $0x230] sm:$0xff]
      %v1141 = vld [vmem:[%s5 + $0x238] sm:$0xff]
      %v1142 = vld [vmem:[%s5 + $0x240] sm:$0xff]
      %v1143 = vld [vmem:[%s5 + $0x248] sm:$0xf]
      %v1144 = vld [vmem:[%s5 + $0x24c] sm:$0xff]
      %v1145 = vld [vmem:[%s5 + $0x254] sm:$0xff]
      %v1146 = vld [vmem:[%s5 + $0x25c] sm:$0xff]
      %v1147 = vld [vmem:[%s5 + $0x264] sm:$0xf]
      %v1148 = vld [vmem:[%s5 + $0x268] sm:$0xff]
      %v1149 = vld [vmem:[%s5 + $0x270] sm:$0xff]
      %v1150 = vld [vmem:[%s5 + $0x278] sm:$0xff]
      %v1151 = vld [vmem:[%s5 + $0x280] sm:$0xf]
      %v1152 = vld [vmem:[%s5 + $0x284] sm:$0xff]
      %v1153 = vld [vmem:[%s5 + $0x28c] sm:$0xff]
      %v1154 = vld [vmem:[%s5 + $0x294] sm:$0xff]
      %v1155 = vld [vmem:[%s5 + $0x29c] sm:$0xf]
      %v1156 = vld [vmem:[%s5 + $0x2a0] sm:$0xff]
      %v1157 = vld [vmem:[%s5 + $0x2a8] sm:$0xff]
      %v1158 = vld [vmem:[%s5 + $0x2b0] sm:$0xff]
      %v1159 = vld [vmem:[%s5 + $0x2b8] sm:$0xf]
      %v1160 = vld [vmem:[%s6] sm:$0x7f]
      %v1162 = vlaneseq
      %v1163 = vshrl.u32 %v1162, 7
      %v1164 = vsub.s32 0, %v1163
      %v1165 = vrot.slane %v1160, %v1164
      %v1166 = vlaneseq
      %v1167 = vshrl.u32 %v1166, 7
      %v1168 = vsub.s32 1, %v1167
      %v1169 = vrot.slane %v1160, %v1168
      %v1170 = vlaneseq
      %v1171 = vshrl.u32 %v1170, 7
      %v1172 = vsub.s32 2, %v1171
      %v1173 = vrot.slane %v1160, %v1172
      %v1174 = vlaneseq
      %v1175 = vshrl.u32 %v1174, 7
      %v1176 = vsub.s32 3, %v1175
      %v1177 = vrot.slane %v1160, %v1176
      %v1178 = vlaneseq
      %v1179 = vshrl.u32 %v1178, 7
      %v1180 = vsub.s32 4, %v1179
      %v1181 = vrot.slane %v1160, %v1180
      %v1182 = vlaneseq
      %v1183 = vshrl.u32 %v1182, 7
      %v1184 = vsub.s32 5, %v1183
      %v1185 = vrot.slane %v1160, %v1184
      %v1186 = vlaneseq
      %v1187 = vshrl.u32 %v1186, 7
      %v1188 = vsub.s32 6, %v1187
      %v1189 = vrot.slane %v1160, %v1188
      %v1297 = vunpack.c.l.b16 %v1060
      %v1298 = vunpack.c.h.b16 %v1060
      %v1299 = vunpack.c.l.b16 %v1061
      %v1300 = vunpack.c.h.b16 %v1061
      %v1301 = vunpack.c.l.b16 %v1062
      %v1302 = vunpack.c.h.b16 %v1062
      %v1303 = vunpack.c.l.b16 %v1063
      %v1304 = vunpack.c.l.b16 %v1064
      %v1305 = vunpack.c.h.b16 %v1064
      %v1306 = vunpack.c.l.b16 %v1065
      %v1307 = vunpack.c.h.b16 %v1065
      %v1308 = vunpack.c.l.b16 %v1066
      %v1309 = vunpack.c.h.b16 %v1066
      %v1310 = vunpack.c.l.b16 %v1067
      %v1311 = vunpack.c.l.b16 %v1068
      %v1312 = vunpack.c.h.b16 %v1068
      %v1313 = vunpack.c.l.b16 %v1069
      %v1314 = vunpack.c.h.b16 %v1069
      %v1315 = vunpack.c.l.b16 %v1070
      %v1316 = vunpack.c.h.b16 %v1070
      %v1317 = vunpack.c.l.b16 %v1071
      %v1318 = vunpack.c.l.b16 %v1072
      %v1319 = vunpack.c.h.b16 %v1072
      %v1320 = vunpack.c.l.b16 %v1073
      %v1321 = vunpack.c.h.b16 %v1073
      %v1322 = vunpack.c.l.b16 %v1074
      %v1323 = vunpack.c.h.b16 %v1074
      %v1324 = vunpack.c.l.b16 %v1075
      %v1325 = vunpack.c.l.b16 %v1076
      %v1326 = vunpack.c.h.b16 %v1076
      %v1327 = vunpack.c.l.b16 %v1077
      %v1328 = vunpack.c.h.b16 %v1077
      %v1329 = vunpack.c.l.b16 %v1078
      %v1330 = vunpack.c.h.b16 %v1078
      %v1331 = vunpack.c.l.b16 %v1079
      %v1332 = vunpack.c.l.b16 %v1080
      %v1333 = vunpack.c.h.b16 %v1080
      %v1334 = vunpack.c.l.b16 %v1081
      %v1335 = vunpack.c.h.b16 %v1081
      %v1336 = vunpack.c.l.b16 %v1082
      %v1337 = vunpack.c.h.b16 %v1082
      %v1338 = vunpack.c.l.b16 %v1083
      %v1339 = vunpack.c.l.b16 %v1084
      %v1340 = vunpack.c.h.b16 %v1084
      %v1341 = vunpack.c.l.b16 %v1085
      %v1342 = vunpack.c.h.b16 %v1085
      %v1343 = vunpack.c.l.b16 %v1086
      %v1344 = vunpack.c.h.b16 %v1086
      %v1345 = vunpack.c.l.b16 %v1087
      %v1346 = vunpack.c.l.b16 %v1088
      %v1347 = vunpack.c.h.b16 %v1088
      %v1348 = vunpack.c.l.b16 %v1089
      %v1349 = vunpack.c.h.b16 %v1089
      %v1350 = vunpack.c.l.b16 %v1090
      %v1351 = vunpack.c.h.b16 %v1090
      %v1352 = vunpack.c.l.b16 %v1091
      %v1353 = vunpack.c.l.b16 %v1092
      %v1354 = vunpack.c.h.b16 %v1092
      %v1355 = vunpack.c.l.b16 %v1093
      %v1356 = vunpack.c.h.b16 %v1093
      %v1357 = vunpack.c.l.b16 %v1094
      %v1358 = vunpack.c.h.b16 %v1094
      %v1359 = vunpack.c.l.b16 %v1095
      %v1360 = vunpack.c.l.b16 %v1096
      %v1361 = vunpack.c.h.b16 %v1096
      %v1362 = vunpack.c.l.b16 %v1097
      %v1363 = vunpack.c.h.b16 %v1097
      %v1364 = vunpack.c.l.b16 %v1098
      %v1365 = vunpack.c.h.b16 %v1098
      %v1366 = vunpack.c.l.b16 %v1099
      %v1367 = vunpack.c.l.b16 %v1100
      %v1368 = vunpack.c.h.b16 %v1100
      %v1369 = vunpack.c.l.b16 %v1101
      %v1370 = vunpack.c.h.b16 %v1101
      %v1371 = vunpack.c.l.b16 %v1102
      %v1372 = vunpack.c.h.b16 %v1102
      %v1373 = vunpack.c.l.b16 %v1103
      %v1374 = vunpack.c.l.b16 %v1104
      %v1375 = vunpack.c.h.b16 %v1104
      %v1376 = vunpack.c.l.b16 %v1105
      %v1377 = vunpack.c.h.b16 %v1105
      %v1378 = vunpack.c.l.b16 %v1106
      %v1379 = vunpack.c.h.b16 %v1106
      %v1380 = vunpack.c.l.b16 %v1107
      %v1381 = vunpack.c.l.b16 %v1108
      %v1382 = vunpack.c.h.b16 %v1108
      %v1383 = vunpack.c.l.b16 %v1109
      %v1384 = vunpack.c.h.b16 %v1109
      %v1385 = vunpack.c.l.b16 %v1110
      %v1386 = vunpack.c.h.b16 %v1110
      %v1387 = vunpack.c.l.b16 %v1111
      %v1388 = vunpack.c.l.b16 %v1112
      %v1389 = vunpack.c.h.b16 %v1112
      %v1390 = vunpack.c.l.b16 %v1113
      %v1391 = vunpack.c.h.b16 %v1113
      %v1392 = vunpack.c.l.b16 %v1114
      %v1393 = vunpack.c.h.b16 %v1114
      %v1394 = vunpack.c.l.b16 %v1115
      %v1395 = vunpack.c.l.b16 %v1116
      %v1396 = vunpack.c.h.b16 %v1116
      %v1397 = vunpack.c.l.b16 %v1117
      %v1398 = vunpack.c.h.b16 %v1117
      %v1399 = vunpack.c.l.b16 %v1118
      %v1400 = vunpack.c.h.b16 %v1118
      %v1401 = vunpack.c.l.b16 %v1119
      %v1402 = vunpack.c.l.b16 %v1120
      %v1403 = vunpack.c.h.b16 %v1120
      %v1404 = vunpack.c.l.b16 %v1121
      %v1405 = vunpack.c.h.b16 %v1121
      %v1406 = vunpack.c.l.b16 %v1122
      %v1407 = vunpack.c.h.b16 %v1122
      %v1408 = vunpack.c.l.b16 %v1123
      %v1409 = vunpack.c.l.b16 %v1124
      %v1410 = vunpack.c.h.b16 %v1124
      %v1411 = vunpack.c.l.b16 %v1125
      %v1412 = vunpack.c.h.b16 %v1125
      %v1413 = vunpack.c.l.b16 %v1126
      %v1414 = vunpack.c.h.b16 %v1126
      %v1415 = vunpack.c.l.b16 %v1127
      %v1416 = vunpack.c.l.b16 %v1128
      %v1417 = vunpack.c.h.b16 %v1128
      %v1418 = vunpack.c.l.b16 %v1129
      %v1419 = vunpack.c.h.b16 %v1129
      %v1420 = vunpack.c.l.b16 %v1130
      %v1421 = vunpack.c.h.b16 %v1130
      %v1422 = vunpack.c.l.b16 %v1131
      %v1423 = vunpack.c.l.b16 %v1132
      %v1424 = vunpack.c.h.b16 %v1132
      %v1425 = vunpack.c.l.b16 %v1133
      %v1426 = vunpack.c.h.b16 %v1133
      %v1427 = vunpack.c.l.b16 %v1134
      %v1428 = vunpack.c.h.b16 %v1134
      %v1429 = vunpack.c.l.b16 %v1135
      %v1430 = vunpack.c.l.b16 %v1136
      %v1431 = vunpack.c.h.b16 %v1136
      %v1432 = vunpack.c.l.b16 %v1137
      %v1433 = vunpack.c.h.b16 %v1137
      %v1434 = vunpack.c.l.b16 %v1138
      %v1435 = vunpack.c.h.b16 %v1138
      %v1436 = vunpack.c.l.b16 %v1139
      %v1437 = vunpack.c.l.b16 %v1140
      %v1438 = vunpack.c.h.b16 %v1140
      %v1439 = vunpack.c.l.b16 %v1141
      %v1440 = vunpack.c.h.b16 %v1141
      %v1441 = vunpack.c.l.b16 %v1142
      %v1442 = vunpack.c.h.b16 %v1142
      %v1443 = vunpack.c.l.b16 %v1143
      %v1444 = vunpack.c.l.b16 %v1144
      %v1445 = vunpack.c.h.b16 %v1144
      %v1446 = vunpack.c.l.b16 %v1145
      %v1447 = vunpack.c.h.b16 %v1145
      %v1448 = vunpack.c.l.b16 %v1146
      %v1449 = vunpack.c.h.b16 %v1146
      %v1450 = vunpack.c.l.b16 %v1147
      %v1451 = vunpack.c.l.b16 %v1148
      %v1452 = vunpack.c.h.b16 %v1148
      %v1453 = vunpack.c.l.b16 %v1149
      %v1454 = vunpack.c.h.b16 %v1149
      %v1455 = vunpack.c.l.b16 %v1150
      %v1456 = vunpack.c.h.b16 %v1150
      %v1457 = vunpack.c.l.b16 %v1151
      %v1458 = vunpack.c.l.b16 %v1152
      %v1459 = vunpack.c.h.b16 %v1152
      %v1460 = vunpack.c.l.b16 %v1153
      %v1461 = vunpack.c.h.b16 %v1153
      %v1462 = vunpack.c.l.b16 %v1154
      %v1463 = vunpack.c.h.b16 %v1154
      %v1464 = vunpack.c.l.b16 %v1155
      %v1465 = vunpack.c.l.b16 %v1156
      %v1466 = vunpack.c.h.b16 %v1156
      %v1467 = vunpack.c.l.b16 %v1157
      %v1468 = vunpack.c.h.b16 %v1157
      %v1469 = vunpack.c.l.b16 %v1158
      %v1470 = vunpack.c.h.b16 %v1158
      %v1471 = vunpack.c.l.b16 %v1159
      %v1472 = vpack.c.b16 %v1304, %v1297
      %v1473 = vpack.c.b16 %v1305, %v1298
      %v1474 = vpack.c.b16 %v1306, %v1299
      %v1475 = vpack.c.b16 %v1307, %v1300
      %v1476 = vpack.c.b16 %v1308, %v1301
      %v1477 = vpack.c.b16 %v1309, %v1302
      %v1478 = vpack.c.b16 %v1310, %v1303
      %v1479 = vpack.c.b16 %v1318, %v1311
      %v1480 = vpack.c.b16 %v1319, %v1312
      %v1481 = vpack.c.b16 %v1320, %v1313
      %v1482 = vpack.c.b16 %v1321, %v1314
      %v1483 = vpack.c.b16 %v1322, %v1315
      %v1484 = vpack.c.b16 %v1323, %v1316
      %v1485 = vpack.c.b16 %v1324, %v1317
      %v1486 = vpack.c.b16 %v1332, %v1325
      %v1487 = vpack.c.b16 %v1333, %v1326
      %v1488 = vpack.c.b16 %v1334, %v1327
      %v1489 = vpack.c.b16 %v1335, %v1328
      %v1490 = vpack.c.b16 %v1336, %v1329
      %v1491 = vpack.c.b16 %v1337, %v1330
      %v1492 = vpack.c.b16 %v1338, %v1331
      %v1493 = vpack.c.b16 %v1346, %v1339
      %v1494 = vpack.c.b16 %v1347, %v1340
      %v1495 = vpack.c.b16 %v1348, %v1341
      %v1496 = vpack.c.b16 %v1349, %v1342
      %v1497 = vpack.c.b16 %v1350, %v1343
      %v1498 = vpack.c.b16 %v1351, %v1344
      %v1499 = vpack.c.b16 %v1352, %v1345
      %v1500 = vpack.c.b16 %v1360, %v1353
      %v1501 = vpack.c.b16 %v1361, %v1354
      %v1502 = vpack.c.b16 %v1362, %v1355
      %v1503 = vpack.c.b16 %v1363, %v1356
      %v1504 = vpack.c.b16 %v1364, %v1357
      %v1505 = vpack.c.b16 %v1365, %v1358
      %v1506 = vpack.c.b16 %v1366, %v1359
      %v1507 = vpack.c.b16 %v1374, %v1367
      %v1508 = vpack.c.b16 %v1375, %v1368
      %v1509 = vpack.c.b16 %v1376, %v1369
      %v1510 = vpack.c.b16 %v1377, %v1370
      %v1511 = vpack.c.b16 %v1378, %v1371
      %v1512 = vpack.c.b16 %v1379, %v1372
      %v1513 = vpack.c.b16 %v1380, %v1373
      %v1514 = vpack.c.b16 %v1388, %v1381
      %v1515 = vpack.c.b16 %v1389, %v1382
      %v1516 = vpack.c.b16 %v1390, %v1383
      %v1517 = vpack.c.b16 %v1391, %v1384
      %v1518 = vpack.c.b16 %v1392, %v1385
      %v1519 = vpack.c.b16 %v1393, %v1386
      %v1520 = vpack.c.b16 %v1394, %v1387
      %v1521 = vpack.c.b16 %v1402, %v1395
      %v1522 = vpack.c.b16 %v1403, %v1396
      %v1523 = vpack.c.b16 %v1404, %v1397
      %v1524 = vpack.c.b16 %v1405, %v1398
      %v1525 = vpack.c.b16 %v1406, %v1399
      %v1526 = vpack.c.b16 %v1407, %v1400
      %v1527 = vpack.c.b16 %v1408, %v1401
      %v1528 = vpack.c.b16 %v1416, %v1409
      %v1529 = vpack.c.b16 %v1417, %v1410
      %v1530 = vpack.c.b16 %v1418, %v1411
      %v1531 = vpack.c.b16 %v1419, %v1412
      %v1532 = vpack.c.b16 %v1420, %v1413
      %v1533 = vpack.c.b16 %v1421, %v1414
      %v1534 = vpack.c.b16 %v1422, %v1415
      %v1535 = vpack.c.b16 %v1430, %v1423
      %v1536 = vpack.c.b16 %v1431, %v1424
      %v1537 = vpack.c.b16 %v1432, %v1425
      %v1538 = vpack.c.b16 %v1433, %v1426
      %v1539 = vpack.c.b16 %v1434, %v1427
      %v1540 = vpack.c.b16 %v1435, %v1428
      %v1541 = vpack.c.b16 %v1436, %v1429
      %v1542 = vpack.c.b16 %v1444, %v1437
      %v1543 = vpack.c.b16 %v1445, %v1438
      %v1544 = vpack.c.b16 %v1446, %v1439
      %v1545 = vpack.c.b16 %v1447, %v1440
      %v1546 = vpack.c.b16 %v1448, %v1441
      %v1547 = vpack.c.b16 %v1449, %v1442
      %v1548 = vpack.c.b16 %v1450, %v1443
      %v1549 = vpack.c.b16 %v1458, %v1451
      %v1550 = vpack.c.b16 %v1459, %v1452
      %v1551 = vpack.c.b16 %v1460, %v1453
      %v1552 = vpack.c.b16 %v1461, %v1454
      %v1553 = vpack.c.b16 %v1462, %v1455
      %v1554 = vpack.c.b16 %v1463, %v1456
      %v1555 = vpack.c.b16 %v1464, %v1457
      %v1556 = vpack.c.b16 %v1465, %v1465
      %v1557 = vpack.c.b16 %v1466, %v1466
      %v1558 = vpack.c.b16 %v1467, %v1467
      %v1559 = vpack.c.b16 %v1468, %v1468
      %v1560 = vpack.c.b16 %v1469, %v1469
      %v1561 = vpack.c.b16 %v1470, %v1470
      %v1562 = vpack.c.b16 %v1471, %v1471
      %v1648 = vsel %vm666, %v1045, 0
      %v1651 = vsel %vm666, %v1047, 0
      %v1654 = vsel %vm666, %v1049, 0
      %v1657 = vsel %vm666, %v1051, 0
      %v1660 = vsel %vm666, %v1053, 0
      %v1663 = vsel %vm666, %v1055, 0
      %v1666 = vsel %vm666, %v1057, 0
      %v1669 = vsel %vm666, %v1059, 0
      %vm1671 = vcmask 1043456
      %v1673 = vsel %vm1671, %v1556, 0
      %v1676 = vsel %vm1671, %v1557, 0
      %v1679 = vsel %vm1671, %v1558, 0
      %v1682 = vsel %vm1671, %v1559, 0
      %v1685 = vsel %vm1671, %v1560, 0
      %v1688 = vsel %vm1671, %v1561, 0
      %v1691 = vsel %vm1671, %v1562, 0
      %1693 = vmatprep.subr.bf16.mxu0 %v1473
      %1694 = vmatpush1.bf16.msra.mxu0 %v1472
      %1695 = vmatprep.subr.bf16.mxu0 %v1480
      %1696 = vmatpush1.bf16.msra.mxu0 %v1479
      %1697 = vmatprep.subr.bf16.mxu0 %v1487
      %1698 = vmatpush1.bf16.msra.mxu0 %v1486
      %1699 = vmatprep.subr.bf16.mxu0 %v1494
      %1700 = vmatpush1.bf16.msra.mxu0 %v1493
      %1701 = vmatprep.subr.bf16.mxu0 %v1501
      %1702 = vmatpush1.bf16.msra.mxu0 %v1500
      %1703 = vmatprep.subr.bf16.mxu0 %v1508
      %1704 = vmatpush1.bf16.msra.mxu0 %v1507
      %1705 = vmatprep.subr.bf16.mxu0 %v1515
      %1706 = vmatpush1.bf16.msra.mxu0 %v1514
      %1707 = vmatprep.subr.bf16.mxu0 %v1522
      %1708 = vmatpush1.bf16.msra.mxu0 %v1521
      %1709 = vmatprep.subr.bf16.mxu0 %v1529
      %1710 = vmatpush1.bf16.msra.mxu0 %v1528
      %1711 = vmatprep.subr.bf16.mxu0 %v1536
      %1712 = vmatpush1.bf16.msra.mxu0 %v1535
      %1713 = vmatprep.subr.bf16.mxu0 %v1543
      %1714 = vmatpush1.bf16.msra.mxu0 %v1542
      %1715 = vmatprep.subr.bf16.mxu0 %v1550
      %1716 = vmatpush1.bf16.msra.mxu0 %v1549
      %1717 = vmatprep.subr.bf16.mxu0 %v1676
      %1718 = vmatpush1.bf16.msra.mxu0 %v1673
      %1719 = vmatprep.subr.bf16.mxu0 0
      %1720 = vmatpush1.bf16.msra.mxu0 0
      %1721 = vmatprep.subr.bf16.mxu0 0
      %1722 = vmatpush1.bf16.msra.mxu0 0
      %1723 = vmatprep.subr.bf16.mxu0 0
      %1724 = vmatpush1.bf16.msra.mxu0 0
      %1725 = vmatprep.mubr.bf16.mxu0 %v1648
      %1726 = vmatmul.mubr.bf16.gmra.mrb[0].mxu0 %v1044
      %v1727 = vpop.f32.mrb[0].mxu0
      %v1728 = vadd.f32 %v1165, %v1727
      %v1729 = vpop.f32.mrb[0].mxu0
      %v1730 = vadd.f32 %v1169, %v1729
      %v1731 = vpop.f32.mrb[0].mxu0
      %v1732 = vadd.f32 %v1165, %v1731
      %v1733 = vpop.f32.mrb[0].mxu0
      %v1734 = vadd.f32 %v1169, %v1733
      %1735 = vmatprep.mubr.bf16.mxu0 %v1651
      %1736 = vmatmul.mubr.bf16.gmra.mrb[0].mxu0 %v1046
      %v1737 = vpop.f32.mrb[0].mxu0
      %v1738 = vadd.f32 %v1165, %v1737
      %v1739 = vpop.f32.mrb[0].mxu0
      %v1740 = vadd.f32 %v1169, %v1739
      %v1741 = vpop.f32.mrb[0].mxu0
      %v1742 = vadd.f32 %v1165, %v1741
      %v1743 = vpop.f32.mrb[0].mxu0
      %v1744 = vadd.f32 %v1169, %v1743
      %1745 = vmatprep.mubr.bf16.mxu0 %v1654
      %1746 = vmatmul.mubr.bf16.gmra.mrb[0].mxu0 %v1048
      %v1747 = vpop.f32.mrb[0].mxu0
      %v1748 = vadd.f32 %v1165, %v1747
      %v1749 = vpop.f32.mrb[0].mxu0
      %v1750 = vadd.f32 %v1169, %v1749
      %v1751 = vpop.f32.mrb[0].mxu0
      %v1752 = vadd.f32 %v1165, %v1751
      %v1753 = vpop.f32.mrb[0].mxu0
      %v1754 = vadd.f32 %v1169, %v1753
      %1755 = vmatprep.mubr.bf16.mxu0 %v1657
      %1756 = vmatmul.mubr.bf16.gmra.mrb[0].mxu0 %v1050
      %v1757 = vpop.f32.mrb[0].mxu0
      %v1758 = vadd.f32 %v1165, %v1757
      %v1759 = vpop.f32.mrb[0].mxu0
      %v1760 = vadd.f32 %v1169, %v1759
      %v1761 = vpop.f32.mrb[0].mxu0
      %v1762 = vadd.f32 %v1165, %v1761
      %v1763 = vpop.f32.mrb[0].mxu0
      %v1764 = vadd.f32 %v1169, %v1763
      %1765 = vmatprep.mubr.bf16.mxu0 %v1660
      %1766 = vmatmul.mubr.bf16.gmra.mrb[0].mxu0 %v1052
      %v1767 = vpop.f32.mrb[0].mxu0
      %v1768 = vadd.f32 %v1165, %v1767
      %v1769 = vpop.f32.mrb[0].mxu0
      %v1770 = vadd.f32 %v1169, %v1769
      %v1771 = vpop.f32.mrb[0].mxu0
      %v1772 = vadd.f32 %v1165, %v1771
      %v1773 = vpop.f32.mrb[0].mxu0
      %v1774 = vadd.f32 %v1169, %v1773
      %1775 = vmatprep.mubr.bf16.mxu0 %v1663
      %1776 = vmatmul.mubr.bf16.gmra.mrb[0].mxu0 %v1054
      %v1777 = vpop.f32.mrb[0].mxu0
      %v1778 = vadd.f32 %v1165, %v1777
      %v1779 = vpop.f32.mrb[0].mxu0
      %v1780 = vadd.f32 %v1169, %v1779
      %v1781 = vpop.f32.mrb[0].mxu0
      %v1782 = vadd.f32 %v1165, %v1781
      %v1783 = vpop.f32.mrb[0].mxu0
      %v1784 = vadd.f32 %v1169, %v1783
      %1785 = vmatprep.mubr.bf16.mxu0 %v1666
      %1786 = vmatmul.mubr.bf16.gmra.mrb[0].mxu0 %v1056
      %v1787 = vpop.f32.mrb[0].mxu0
      %v1788 = vadd.f32 %v1165, %v1787
      %v1789 = vpop.f32.mrb[0].mxu0
      %v1790 = vadd.f32 %v1169, %v1789
      %v1791 = vpop.f32.mrb[0].mxu0
      %v1792 = vadd.f32 %v1165, %v1791
      %v1793 = vpop.f32.mrb[0].mxu0
      %v1794 = vadd.f32 %v1169, %v1793
      %1795 = vmatprep.mubr.bf16.mxu0 %v1669
      %1796 = vmatmul.mubr.bf16.gmra.mrb[0].mxu0 %v1058
      %v1797 = vpop.f32.mrb[0].mxu0
      %v1798 = vadd.f32 %v1165, %v1797
      %v1799 = vpop.f32.mrb[0].mxu0
      %v1800 = vadd.f32 %v1169, %v1799
      %v1801 = vpop.f32.mrb[0].mxu0
      %v1802 = vadd.f32 %v1165, %v1801
      %v1803 = vpop.f32.mrb[0].mxu0
      %v1804 = vadd.f32 %v1169, %v1803
      %1805 = vdwg.mxu0
      %1806 = vmatprep.subr.bf16.mxu0 %v1475
      %1807 = vmatpush1.bf16.msra.mxu0 %v1474
      %1808 = vmatprep.subr.bf16.mxu0 %v1482
      %1809 = vmatpush1.bf16.msra.mxu0 %v1481
      %1810 = vmatprep.subr.bf16.mxu0 %v1489
      %1811 = vmatpush1.bf16.msra.mxu0 %v1488
      %1812 = vmatprep.subr.bf16.mxu0 %v1496
      %1813 = vmatpush1.bf16.msra.mxu0 %v1495
      %1814 = vmatprep.subr.bf16.mxu0 %v1503
      %1815 = vmatpush1.bf16.msra.mxu0 %v1502
      %1816 = vmatprep.subr.bf16.mxu0 %v1510
      %1817 = vmatpush1.bf16.msra.mxu0 %v1509
      %1818 = vmatprep.subr.bf16.mxu0 %v1517
      %1819 = vmatpush1.bf16.msra.mxu0 %v1516
      %1820 = vmatprep.subr.bf16.mxu0 %v1524
      %1821 = vmatpush1.bf16.msra.mxu0 %v1523
      %1822 = vmatprep.subr.bf16.mxu0 %v1531
      %1823 = vmatpush1.bf16.msra.mxu0 %v1530
      %1824 = vmatprep.subr.bf16.mxu0 %v1538
      %1825 = vmatpush1.bf16.msra.mxu0 %v1537
      %1826 = vmatprep.subr.bf16.mxu0 %v1545
      %1827 = vmatpush1.bf16.msra.mxu0 %v1544
      %1828 = vmatprep.subr.bf16.mxu0 %v1552
      %1829 = vmatpush1.bf16.msra.mxu0 %v1551
      %1830 = vmatprep.subr.bf16.mxu0 %v1682
      %1831 = vmatpush1.bf16.msra.mxu0 %v1679
      %1832 = vmatprep.subr.bf16.mxu0 0
      %1833 = vmatpush1.bf16.msra.mxu0 0
      %1834 = vmatprep.subr.bf16.mxu0 0
      %1835 = vmatpush1.bf16.msra.mxu0 0
      %1836 = vmatprep.subr.bf16.mxu0 0
      %1837 = vmatpush1.bf16.msra.mxu0 0
      %1838 = vmatprep.mubr.bf16.mxu0 %v1648
      %1839 = vmatmul.mubr.bf16.gmra.mrb[0].mxu0 %v1044
      %v1840 = vpop.f32.mrb[0].mxu0
      %v1841 = vadd.f32 %v1173, %v1840
      %v1842 = vpop.f32.mrb[0].mxu0
      %v1843 = vadd.f32 %v1177, %v1842
      %v1844 = vpop.f32.mrb[0].mxu0
      %v1845 = vadd.f32 %v1173, %v1844
      %v1846 = vpop.f32.mrb[0].mxu0
      %v1847 = vadd.f32 %v1177, %v1846
      %1848 = vmatprep.mubr.bf16.mxu0 %v1651
      %1849 = vmatmul.mubr.bf16.gmra.mrb[0].mxu0 %v1046
      %v1850 = vpop.f32.mrb[0].mxu0
      %v1851 = vadd.f32 %v1173, %v1850
      %v1852 = vpop.f32.mrb[0].mxu0
      %v1853 = vadd.f32 %v1177, %v1852
      %v1854 = vpop.f32.mrb[0].mxu0
      %v1855 = vadd.f32 %v1173, %v1854
      %v1856 = vpop.f32.mrb[0].mxu0
      %v1857 = vadd.f32 %v1177, %v1856
      %1858 = vmatprep.mubr.bf16.mxu0 %v1654
      %1859 = vmatmul.mubr.bf16.gmra.mrb[0].mxu0 %v1048
      %v1860 = vpop.f32.mrb[0].mxu0
      %v1861 = vadd.f32 %v1173, %v1860
      %v1862 = vpop.f32.mrb[0].mxu0
      %v1863 = vadd.f32 %v1177, %v1862
      %v1864 = vpop.f32.mrb[0].mxu0
      %v1865 = vadd.f32 %v1173, %v1864
      %v1866 = vpop.f32.mrb[0].mxu0
      %v1867 = vadd.f32 %v1177, %v1866
      %1868 = vmatprep.mubr.bf16.mxu0 %v1657
      %1869 = vmatmul.mubr.bf16.gmra.mrb[0].mxu0 %v1050
      %v1870 = vpop.f32.mrb[0].mxu0
      %v1871 = vadd.f32 %v1173, %v1870
      %v1872 = vpop.f32.mrb[0].mxu0
      %v1873 = vadd.f32 %v1177, %v1872
      %v1874 = vpop.f32.mrb[0].mxu0
      %v1875 = vadd.f32 %v1173, %v1874
      %v1876 = vpop.f32.mrb[0].mxu0
      %v1877 = vadd.f32 %v1177, %v1876
      %1878 = vmatprep.mubr.bf16.mxu0 %v1660
      %1879 = vmatmul.mubr.bf16.gmra.mrb[0].mxu0 %v1052
      %v1880 = vpop.f32.mrb[0].mxu0
      %v1881 = vadd.f32 %v1173, %v1880
      %v1882 = vpop.f32.mrb[0].mxu0
      %v1883 = vadd.f32 %v1177, %v1882
      %v1884 = vpop.f32.mrb[0].mxu0
      %v1885 = vadd.f32 %v1173, %v1884
      %v1886 = vpop.f32.mrb[0].mxu0
      %v1887 = vadd.f32 %v1177, %v1886
      %1888 = vmatprep.mubr.bf16.mxu0 %v1663
      %1889 = vmatmul.mubr.bf16.gmra.mrb[0].mxu0 %v1054
      %v1890 = vpop.f32.mrb[0].mxu0
      %v1891 = vadd.f32 %v1173, %v1890
      %v1892 = vpop.f32.mrb[0].mxu0
      %v1893 = vadd.f32 %v1177, %v1892
      %v1894 = vpop.f32.mrb[0].mxu0
      %v1895 = vadd.f32 %v1173, %v1894
      %v1896 = vpop.f32.mrb[0].mxu0
      %v1897 = vadd.f32 %v1177, %v1896
      %1898 = vmatprep.mubr.bf16.mxu0 %v1666
      %1899 = vmatmul.mubr.bf16.gmra.mrb[0].mxu0 %v1056
      %v1900 = vpop.f32.mrb[0].mxu0
      %v1901 = vadd.f32 %v1173, %v1900
      %v1902 = vpop.f32.mrb[0].mxu0
      %v1903 = vadd.f32 %v1177, %v1902
      %v1904 = vpop.f32.mrb[0].mxu0
      %v1905 = vadd.f32 %v1173, %v1904
      %v1906 = vpop.f32.mrb[0].mxu0
      %v1907 = vadd.f32 %v1177, %v1906
      %1908 = vmatprep.mubr.bf16.mxu0 %v1669
      %1909 = vmatmul.mubr.bf16.gmra.mrb[0].mxu0 %v1058
      %v1910 = vpop.f32.mrb[0].mxu0
      %v1911 = vadd.f32 %v1173, %v1910
      %v1912 = vpop.f32.mrb[0].mxu0
      %v1913 = vadd.f32 %v1177, %v1912
      %v1914 = vpop.f32.mrb[0].mxu0
      %v1915 = vadd.f32 %v1173, %v1914
      %v1916 = vpop.f32.mrb[0].mxu0
      %v1917 = vadd.f32 %v1177, %v1916
      %1918 = vdwg.mxu0
      %1919 = vmatprep.subr.bf16.mxu0 %v1477
      %1920 = vmatpush1.bf16.msra.mxu0 %v1476
      %1921 = vmatprep.subr.bf16.mxu0 %v1484
      %1922 = vmatpush1.bf16.msra.mxu0 %v1483
      %1923 = vmatprep.subr.bf16.mxu0 %v1491
      %1924 = vmatpush1.bf16.msra.mxu0 %v1490
      %1925 = vmatprep.subr.bf16.mxu0 %v1498
      %1926 = vmatpush1.bf16.msra.mxu0 %v1497
      %1927 = vmatprep.subr.bf16.mxu0 %v1505
      %1928 = vmatpush1.bf16.msra.mxu0 %v1504
      %1929 = vmatprep.subr.bf16.mxu0 %v1512
      %1930 = vmatpush1.bf16.msra.mxu0 %v1511
      %1931 = vmatprep.subr.bf16.mxu0 %v1519
      %1932 = vmatpush1.bf16.msra.mxu0 %v1518
      %1933 = vmatprep.subr.bf16.mxu0 %v1526
      %1934 = vmatpush1.bf16.msra.mxu0 %v1525
      %1935 = vmatprep.subr.bf16.mxu0 %v1533
      %1936 = vmatpush1.bf16.msra.mxu0 %v1532
      %1937 = vmatprep.subr.bf16.mxu0 %v1540
      %1938 = vmatpush1.bf16.msra.mxu0 %v1539
      %1939 = vmatprep.subr.bf16.mxu0 %v1547
      %1940 = vmatpush1.bf16.msra.mxu0 %v1546
      %1941 = vmatprep.subr.bf16.mxu0 %v1554
      %1942 = vmatpush1.bf16.msra.mxu0 %v1553
      %1943 = vmatprep.subr.bf16.mxu0 %v1688
      %1944 = vmatpush1.bf16.msra.mxu0 %v1685
      %1945 = vmatprep.subr.bf16.mxu0 0
      %1946 = vmatpush1.bf16.msra.mxu0 0
      %1947 = vmatprep.subr.bf16.mxu0 0
      %1948 = vmatpush1.bf16.msra.mxu0 0
      %1949 = vmatprep.subr.bf16.mxu0 0
      %1950 = vmatpush1.bf16.msra.mxu0 0
      %1951 = vmatprep.mubr.bf16.mxu0 %v1648
      %1952 = vmatmul.mubr.bf16.gmra.mrb[0].mxu0 %v1044
      %v1953 = vpop.f32.mrb[0].mxu0
      %v1954 = vadd.f32 %v1181, %v1953
      %v1955 = vpop.f32.mrb[0].mxu0
      %v1956 = vadd.f32 %v1185, %v1955
      %v1957 = vpop.f32.mrb[0].mxu0
      %v1958 = vadd.f32 %v1181, %v1957
      %v1959 = vpop.f32.mrb[0].mxu0
      %v1960 = vadd.f32 %v1185, %v1959
      %1961 = vmatprep.mubr.bf16.mxu0 %v1651
      %1962 = vmatmul.mubr.bf16.gmra.mrb[0].mxu0 %v1046
      %v1963 = vpop.f32.mrb[0].mxu0
      %v1964 = vadd.f32 %v1181, %v1963
      %v1965 = vpop.f32.mrb[0].mxu0
      %v1966 = vadd.f32 %v1185, %v1965
      %v1967 = vpop.f32.mrb[0].mxu0
      %v1968 = vadd.f32 %v1181, %v1967
      %v1969 = vpop.f32.mrb[0].mxu0
      %v1970 = vadd.f32 %v1185, %v1969
      %1971 = vmatprep.mubr.bf16.mxu0 %v1654
      %1972 = vmatmul.mubr.bf16.gmra.mrb[0].mxu0 %v1048
      %v1973 = vpop.f32.mrb[0].mxu0
      %v1974 = vadd.f32 %v1181, %v1973
      %v1975 = vpop.f32.mrb[0].mxu0
      %v1976 = vadd.f32 %v1185, %v1975
      %v1977 = vpop.f32.mrb[0].mxu0
      %v1978 = vadd.f32 %v1181, %v1977
      %v1979 = vpop.f32.mrb[0].mxu0
      %v1980 = vadd.f32 %v1185, %v1979
      %1981 = vmatprep.mubr.bf16.mxu0 %v1657
      %1982 = vmatmul.mubr.bf16.gmra.mrb[0].mxu0 %v1050
      %v1983 = vpop.f32.mrb[0].mxu0
      %v1984 = vadd.f32 %v1181, %v1983
      %v1985 = vpop.f32.mrb[0].mxu0
      %v1986 = vadd.f32 %v1185, %v1985
      %v1987 = vpop.f32.mrb[0].mxu0
      %v1988 = vadd.f32 %v1181, %v1987
      %v1989 = vpop.f32.mrb[0].mxu0
      %v1990 = vadd.f32 %v1185, %v1989
      %1991 = vmatprep.mubr.bf16.mxu0 %v1660
      %1992 = vmatmul.mubr.bf16.gmra.mrb[0].mxu0 %v1052
      %v1993 = vpop.f32.mrb[0].mxu0
      %v1994 = vadd.f32 %v1181, %v1993
      %v1995 = vpop.f32.mrb[0].mxu0
      %v1996 = vadd.f32 %v1185, %v1995
      %v1997 = vpop.f32.mrb[0].mxu0
      %v1998 = vadd.f32 %v1181, %v1997
      %v1999 = vpop.f32.mrb[0].mxu0
      %v2000 = vadd.f32 %v1185, %v1999
      %2001 = vmatprep.mubr.bf16.mxu0 %v1663
      %2002 = vmatmul.mubr.bf16.gmra.mrb[0].mxu0 %v1054
      %v2003 = vpop.f32.mrb[0].mxu0
      %v2004 = vadd.f32 %v1181, %v2003
      %v2005 = vpop.f32.mrb[0].mxu0
      %v2006 = vadd.f32 %v1185, %v2005
      %v2007 = vpop.f32.mrb[0].mxu0
      %v2008 = vadd.f32 %v1181, %v2007
      %v2009 = vpop.f32.mrb[0].mxu0
      %v2010 = vadd.f32 %v1185, %v2009
      %2011 = vmatprep.mubr.bf16.mxu0 %v1666
      %2012 = vmatmul.mubr.bf16.gmra.mrb[0].mxu0 %v1056
      %v2013 = vpop.f32.mrb[0].mxu0
      %v2014 = vadd.f32 %v1181, %v2013
      %v2015 = vpop.f32.mrb[0].mxu0
      %v2016 = vadd.f32 %v1185, %v2015
      %v2017 = vpop.f32.mrb[0].mxu0
      %v2018 = vadd.f32 %v1181, %v2017
      %v2019 = vpop.f32.mrb[0].mxu0
      %v2020 = vadd.f32 %v1185, %v2019
      %2021 = vmatprep.mubr.bf16.mxu0 %v1669
      %2022 = vmatmul.mubr.bf16.gmra.mrb[0].mxu0 %v1058
      %v2023 = vpop.f32.mrb[0].mxu0
      %v2024 = vadd.f32 %v1181, %v2023
      %v2025 = vpop.f32.mrb[0].mxu0
      %v2026 = vadd.f32 %v1185, %v2025
      %v2027 = vpop.f32.mrb[0].mxu0
      %v2028 = vadd.f32 %v1181, %v2027
      %v2029 = vpop.f32.mrb[0].mxu0
      %v2030 = vadd.f32 %v1185, %v2029
      %2031 = vdwg.mxu0
      %2032 = vmatprep.subr.bf16.mxu0 0
      %2033 = vmatpush1.bf16.msra.mxu0 %v1478
      %2034 = vmatprep.subr.bf16.mxu0 0
      %2035 = vmatpush1.bf16.msra.mxu0 %v1485
      %2036 = vmatprep.subr.bf16.mxu0 0
      %2037 = vmatpush1.bf16.msra.mxu0 %v1492
      %2038 = vmatprep.subr.bf16.mxu0 0
      %2039 = vmatpush1.bf16.msra.mxu0 %v1499
      %2040 = vmatprep.subr.bf16.mxu0 0
      %2041 = vmatpush1.bf16.msra.mxu0 %v1506
      %2042 = vmatprep.subr.bf16.mxu0 0
      %2043 = vmatpush1.bf16.msra.mxu0 %v1513
      %2044 = vmatprep.subr.bf16.mxu0 0
      %2045 = vmatpush1.bf16.msra.mxu0 %v1520
      %2046 = vmatprep.subr.bf16.mxu0 0
      %2047 = vmatpush1.bf16.msra.mxu0 %v1527
      %2048 = vmatprep.subr.bf16.mxu0 0
      %2049 = vmatpush1.bf16.msra.mxu0 %v1534
      %2050 = vmatprep.subr.bf16.mxu0 0
      %2051 = vmatpush1.bf16.msra.mxu0 %v1541
      %2052 = vmatprep.subr.bf16.mxu0 0
      %2053 = vmatpush1.bf16.msra.mxu0 %v1548
      %2054 = vmatprep.subr.bf16.mxu0 0
      %2055 = vmatpush1.bf16.msra.mxu0 %v1555
      %2056 = vmatprep.subr.bf16.mxu0 0
      %2057 = vmatpush1.bf16.msra.mxu0 %v1691
      %2058 = vmatprep.subr.bf16.mxu0 0
      %2059 = vmatpush1.bf16.msra.mxu0 0
      %2060 = vmatprep.subr.bf16.mxu0 0
      %2061 = vmatpush1.bf16.msra.mxu0 0
      %2062 = vmatprep.subr.bf16.mxu0 0
      %2063 = vmatpush1.bf16.msra.mxu0 0
      %2064 = vmatprep.mubr.bf16.mxu0 %v1648
      %2065 = vmatmul.mubr.bf16.gmra.mrb[0].mxu0 %v1044
      %v2066 = vpop.f32.mrb[0].mxu0
      %v2067 = vadd.f32 %v1189, %v2066
      %v2068 = vpop.f32.mrb[0].mxu0
      %v2069 = vpop.f32.mrb[0].mxu0
      %v2070 = vadd.f32 %v1189, %v2069
      %v2071 = vpop.f32.mrb[0].mxu0
      %2072 = vmatprep.mubr.bf16.mxu0 %v1651
      %2073 = vmatmul.mubr.bf16.gmra.mrb[0].mxu0 %v1046
      %v2074 = vpop.f32.mrb[0].mxu0
      %v2075 = vadd.f32 %v1189, %v2074
      %v2076 = vpop.f32.mrb[0].mxu0
      %v2077 = vpop.f32.mrb[0].mxu0
      %v2078 = vadd.f32 %v1189, %v2077
      %v2079 = vpop.f32.mrb[0].mxu0
      %2080 = vmatprep.mubr.bf16.mxu0 %v1654
      %2081 = vmatmul.mubr.bf16.gmra.mrb[0].mxu0 %v1048
      %v2082 = vpop.f32.mrb[0].mxu0
      %v2083 = vadd.f32 %v1189, %v2082
      %v2084 = vpop.f32.mrb[0].mxu0
      %v2085 = vpop.f32.mrb[0].mxu0
      %v2086 = vadd.f32 %v1189, %v2085
      %v2087 = vpop.f32.mrb[0].mxu0
      %2088 = vmatprep.mubr.bf16.mxu0 %v1657
      %2089 = vmatmul.mubr.bf16.gmra.mrb[0].mxu0 %v1050
      %v2090 = vpop.f32.mrb[0].mxu0
      %v2091 = vadd.f32 %v1189, %v2090
      %v2092 = vpop.f32.mrb[0].mxu0
      %v2093 = vpop.f32.mrb[0].mxu0
      %v2094 = vadd.f32 %v1189, %v2093
      %v2095 = vpop.f32.mrb[0].mxu0
      %2096 = vmatprep.mubr.bf16.mxu0 %v1660
      %2097 = vmatmul.mubr.bf16.gmra.mrb[0].mxu0 %v1052
      %v2098 = vpop.f32.mrb[0].mxu0
      %v2099 = vadd.f32 %v1189, %v2098
      %v2100 = vpop.f32.mrb[0].mxu0
      %v2101 = vpop.f32.mrb[0].mxu0
      %v2102 = vadd.f32 %v1189, %v2101
      %v2103 = vpop.f32.mrb[0].mxu0
      %2104 = vmatprep.mubr.bf16.mxu0 %v1663
      %2105 = vmatmul.mubr.bf16.gmra.mrb[0].mxu0 %v1054
      %v2106 = vpop.f32.mrb[0].mxu0
      %v2107 = vadd.f32 %v1189, %v2106
      %v2108 = vpop.f32.mrb[0].mxu0
      %v2109 = vpop.f32.mrb[0].mxu0
      %v2110 = vadd.f32 %v1189, %v2109
      %v2111 = vpop.f32.mrb[0].mxu0
      %2112 = vmatprep.mubr.bf16.mxu0 %v1666
      %2113 = vmatmul.mubr.bf16.gmra.mrb[0].mxu0 %v1056
      %v2114 = vpop.f32.mrb[0].mxu0
      %v2115 = vadd.f32 %v1189, %v2114
      %v2116 = vpop.f32.mrb[0].mxu0
      %v2117 = vpop.f32.mrb[0].mxu0
      %v2118 = vadd.f32 %v1189, %v2117
      %v2119 = vpop.f32.mrb[0].mxu0
      %2120 = vmatprep.mubr.bf16.mxu0 %v1669
      %2121 = vmatmul.mubr.bf16.gmra.mrb[0].mxu0 %v1058
      %v2122 = vpop.f32.mrb[0].mxu0
      %v2123 = vadd.f32 %v1189, %v2122
      %v2124 = vpop.f32.mrb[0].mxu0
      %v2125 = vpop.f32.mrb[0].mxu0
      %v2126 = vadd.f32 %v1189, %v2125
      %v2127 = vpop.f32.mrb[0].mxu0
      %2128 = vdwg.mxu0
      %v2129 = vtanh.pop %v1728
      %v2130 = vtanh.pop %v1730
      %v2131 = vtanh.pop %v1841
      %v2132 = vtanh.pop %v1843
      %v2133 = vtanh.pop %v1954
      %v2134 = vtanh.pop %v1956
      %v2135 = vtanh.pop %v2067
      %v2136 = vtanh.pop %v1732
      %v2137 = vtanh.pop %v1734
      %v2138 = vtanh.pop %v1845
      %v2139 = vtanh.pop %v1847
      %v2140 = vtanh.pop %v1958
      %v2141 = vtanh.pop %v1960
      %v2142 = vtanh.pop %v2070
      %v2143 = vtanh.pop %v1738
      %v2144 = vtanh.pop %v1740
      %v2145 = vtanh.pop %v1851
      %v2146 = vtanh.pop %v1853
      %v2147 = vtanh.pop %v1964
      %v2148 = vtanh.pop %v1966
      %v2149 = vtanh.pop %v2075
      %v2150 = vtanh.pop %v1742
      %v2151 = vtanh.pop %v1744
      %v2152 = vtanh.pop %v1855
      %v2153 = vtanh.pop %v1857
      %v2154 = vtanh.pop %v1968
      %v2155 = vtanh.pop %v1970
      %v2156 = vtanh.pop %v2078
      %v2157 = vtanh.pop %v1748
      %v2158 = vtanh.pop %v1750
      %v2159 = vtanh.pop %v1861
      %v2160 = vtanh.pop %v1863
      %v2161 = vtanh.pop %v1974
      %v2162 = vtanh.pop %v1976
      %v2163 = vtanh.pop %v2083
      %v2164 = vtanh.pop %v1752
      %v2165 = vtanh.pop %v1754
      %v2166 = vtanh.pop %v1865
      %v2167 = vtanh.pop %v1867
      %v2168 = vtanh.pop %v1978
      %v2169 = vtanh.pop %v1980
      %v2170 = vtanh.pop %v2086
      %v2171 = vtanh.pop %v1758
      %v2172 = vtanh.pop %v1760
      %v2173 = vtanh.pop %v1871
      %v2174 = vtanh.pop %v1873
      %v2175 = vtanh.pop %v1984
      %v2176 = vtanh.pop %v1986
      %v2177 = vtanh.pop %v2091
      %v2178 = vtanh.pop %v1762
      %v2179 = vtanh.pop %v1764
      %v2180 = vtanh.pop %v1875
      %v2181 = vtanh.pop %v1877
      %v2182 = vtanh.pop %v1988
      %v2183 = vtanh.pop %v1990
      %v2184 = vtanh.pop %v2094
      %v2185 = vtanh.pop %v1768
      %v2186 = vtanh.pop %v1770
      %v2187 = vtanh.pop %v1881
      %v2188 = vtanh.pop %v1883
      %v2189 = vtanh.pop %v1994
      %v2190 = vtanh.pop %v1996
      %v2191 = vtanh.pop %v2099
      %v2192 = vtanh.pop %v1772
      %v2193 = vtanh.pop %v1774
      %v2194 = vtanh.pop %v1885
      %v2195 = vtanh.pop %v1887
      %v2196 = vtanh.pop %v1998
      %v2197 = vtanh.pop %v2000
      %v2198 = vtanh.pop %v2102
      %v2199 = vtanh.pop %v1778
      %v2200 = vtanh.pop %v1780
      %v2201 = vtanh.pop %v1891
      %v2202 = vtanh.pop %v1893
      %v2203 = vtanh.pop %v2004
      %v2204 = vtanh.pop %v2006
      %v2205 = vtanh.pop %v2107
      %v2206 = vtanh.pop %v1782
      %v2207 = vtanh.pop %v1784
      %v2208 = vtanh.pop %v1895
      %v2209 = vtanh.pop %v1897
      %v2210 = vtanh.pop %v2008
      %v2211 = vtanh.pop %v2010
      %v2212 = vtanh.pop %v2110
      %v2213 = vtanh.pop %v1788
      %v2214 = vtanh.pop %v1790
      %v2215 = vtanh.pop %v1901
      %v2216 = vtanh.pop %v1903
      %v2217 = vtanh.pop %v2014
      %v2218 = vtanh.pop %v2016
      %v2219 = vtanh.pop %v2115
      %v2220 = vtanh.pop %v1792
      %v2221 = vtanh.pop %v1794
      %v2222 = vtanh.pop %v1905
      %v2223 = vtanh.pop %v1907
      %v2224 = vtanh.pop %v2018
      %v2225 = vtanh.pop %v2020
      %v2226 = vtanh.pop %v2118
      %v2227 = vtanh.pop %v1798
      %v2228 = vtanh.pop %v1800
      %v2229 = vtanh.pop %v1911
      %v2230 = vtanh.pop %v1913
      %v2231 = vtanh.pop %v2024
      %v2232 = vtanh.pop %v2026
      %v2233 = vtanh.pop %v2123
      %v2234 = vtanh.pop %v1802
      %v2235 = vtanh.pop %v1804
      %v2236 = vtanh.pop %v1915
      %v2237 = vtanh.pop %v1917
      %v2238 = vtanh.pop %v2028
      %v2239 = vtanh.pop %v2030
      %v2240 = vtanh.pop %v2126
      %v2241 = vmul.f32 %v2129, 0.5
      %v2242 = vmul.f32 %v2130, 0.5
      %v2243 = vmul.f32 %v2131, 0.5
      %v2244 = vmul.f32 %v2132, 0.5
      %v2245 = vmul.f32 %v2133, 0.5
      %v2246 = vmul.f32 %v2134, 0.5
      %v2247 = vmul.f32 %v2135, 0.5
      %v2248 = vmul.f32 %v2136, 0.5
      %v2249 = vmul.f32 %v2137, 0.5
      %v2250 = vmul.f32 %v2138, 0.5
      %v2251 = vmul.f32 %v2139, 0.5
      %v2252 = vmul.f32 %v2140, 0.5
      %v2253 = vmul.f32 %v2141, 0.5
      %v2254 = vmul.f32 %v2142, 0.5
      %v2255 = vmul.f32 %v2143, 0.5
      %v2256 = vmul.f32 %v2144, 0.5
      %v2257 = vmul.f32 %v2145, 0.5
      %v2258 = vmul.f32 %v2146, 0.5
      %v2259 = vmul.f32 %v2147, 0.5
      %v2260 = vmul.f32 %v2148, 0.5
      %v2261 = vmul.f32 %v2149, 0.5
      %v2262 = vmul.f32 %v2150, 0.5
      %v2263 = vmul.f32 %v2151, 0.5
      %v2264 = vmul.f32 %v2152, 0.5
      %v2265 = vmul.f32 %v2153, 0.5
      %v2266 = vmul.f32 %v2154, 0.5
      %v2267 = vmul.f32 %v2155, 0.5
      %v2268 = vmul.f32 %v2156, 0.5
      %v2269 = vmul.f32 %v2157, 0.5
      %v2270 = vmul.f32 %v2158, 0.5
      %v2271 = vmul.f32 %v2159, 0.5
      %v2272 = vmul.f32 %v2160, 0.5
      %v2273 = vmul.f32 %v2161, 0.5
      %v2274 = vmul.f32 %v2162, 0.5
      %v2275 = vmul.f32 %v2163, 0.5
      %v2276 = vmul.f32 %v2164, 0.5
      %v2277 = vmul.f32 %v2165, 0.5
      %v2278 = vmul.f32 %v2166, 0.5
      %v2279 = vmul.f32 %v2167, 0.5
      %v2280 = vmul.f32 %v2168, 0.5
      %v2281 = vmul.f32 %v2169, 0.5
      %v2282 = vmul.f32 %v2170, 0.5
      %v2283 = vmul.f32 %v2171, 0.5
      %v2284 = vmul.f32 %v2172, 0.5
      %v2285 = vmul.f32 %v2173, 0.5
      %v2286 = vmul.f32 %v2174, 0.5
      %v2287 = vmul.f32 %v2175, 0.5
      %v2288 = vmul.f32 %v2176, 0.5
      %v2289 = vmul.f32 %v2177, 0.5
      %v2290 = vmul.f32 %v2178, 0.5
      %v2291 = vmul.f32 %v2179, 0.5
      %v2292 = vmul.f32 %v2180, 0.5
      %v2293 = vmul.f32 %v2181, 0.5
      %v2294 = vmul.f32 %v2182, 0.5
      %v2295 = vmul.f32 %v2183, 0.5
      %v2296 = vmul.f32 %v2184, 0.5
      %v2297 = vmul.f32 %v2185, 0.5
      %v2298 = vmul.f32 %v2186, 0.5
      %v2299 = vmul.f32 %v2187, 0.5
      %v2300 = vmul.f32 %v2188, 0.5
      %v2301 = vmul.f32 %v2189, 0.5
      %v2302 = vmul.f32 %v2190, 0.5
      %v2303 = vmul.f32 %v2191, 0.5
      %v2304 = vmul.f32 %v2192, 0.5
      %v2305 = vmul.f32 %v2193, 0.5
      %v2306 = vmul.f32 %v2194, 0.5
      %v2307 = vmul.f32 %v2195, 0.5
      %v2308 = vmul.f32 %v2196, 0.5
      %v2309 = vmul.f32 %v2197, 0.5
      %v2310 = vmul.f32 %v2198, 0.5
      %v2311 = vmul.f32 %v2199, 0.5
      %v2312 = vmul.f32 %v2200, 0.5
      %v2313 = vmul.f32 %v2201, 0.5
      %v2314 = vmul.f32 %v2202, 0.5
      %v2315 = vmul.f32 %v2203, 0.5
      %v2316 = vmul.f32 %v2204, 0.5
      %v2317 = vmul.f32 %v2205, 0.5
      %v2318 = vmul.f32 %v2206, 0.5
      %v2319 = vmul.f32 %v2207, 0.5
      %v2320 = vmul.f32 %v2208, 0.5
      %v2321 = vmul.f32 %v2209, 0.5
      %v2322 = vmul.f32 %v2210, 0.5
      %v2323 = vmul.f32 %v2211, 0.5
      %v2324 = vmul.f32 %v2212, 0.5
      %v2325 = vmul.f32 %v2213, 0.5
      %v2326 = vmul.f32 %v2214, 0.5
      %v2327 = vmul.f32 %v2215, 0.5
      %v2328 = vmul.f32 %v2216, 0.5
      %v2329 = vmul.f32 %v2217, 0.5
      %v2330 = vmul.f32 %v2218, 0.5
      %v2331 = vmul.f32 %v2219, 0.5
      %v2332 = vmul.f32 %v2220, 0.5
      %v2333 = vmul.f32 %v2221, 0.5
      %v2334 = vmul.f32 %v2222, 0.5
      %v2335 = vmul.f32 %v2223, 0.5
      %v2336 = vmul.f32 %v2224, 0.5
      %v2337 = vmul.f32 %v2225, 0.5
      %v2338 = vmul.f32 %v2226, 0.5
      %v2339 = vmul.f32 %v2227, 0.5
      %v2340 = vmul.f32 %v2228, 0.5
      %v2341 = vmul.f32 %v2229, 0.5
      %v2342 = vmul.f32 %v2230, 0.5
      %v2343 = vmul.f32 %v2231, 0.5
      %v2344 = vmul.f32 %v2232, 0.5
      %v2345 = vmul.f32 %v2233, 0.5
      %v2346 = vmul.f32 %v2234, 0.5
      %v2347 = vmul.f32 %v2235, 0.5
      %v2348 = vmul.f32 %v2236, 0.5
      %v2349 = vmul.f32 %v2237, 0.5
      %v2350 = vmul.f32 %v2238, 0.5
      %v2351 = vmul.f32 %v2239, 0.5
      %v2352 = vmul.f32 %v2240, 0.5
      %v2353 = vadd.f32 %v2241, 0.5
      %v2354 = vadd.f32 %v2242, 0.5
      %v2355 = vadd.f32 %v2243, 0.5
      %v2356 = vadd.f32 %v2244, 0.5
      %v2357 = vadd.f32 %v2245, 0.5
      %v2358 = vadd.f32 %v2246, 0.5
      %v2359 = vadd.f32 %v2247, 0.5
      %v2360 = vadd.f32 %v2248, 0.5
      %v2361 = vadd.f32 %v2249, 0.5
      %v2362 = vadd.f32 %v2250, 0.5
      %v2363 = vadd.f32 %v2251, 0.5
      %v2364 = vadd.f32 %v2252, 0.5
      %v2365 = vadd.f32 %v2253, 0.5
      %v2366 = vadd.f32 %v2254, 0.5
      %v2367 = vadd.f32 %v2255, 0.5
      %v2368 = vadd.f32 %v2256, 0.5
      %v2369 = vadd.f32 %v2257, 0.5
      %v2370 = vadd.f32 %v2258, 0.5
      %v2371 = vadd.f32 %v2259, 0.5
      %v2372 = vadd.f32 %v2260, 0.5
      %v2373 = vadd.f32 %v2261, 0.5
      %v2374 = vadd.f32 %v2262, 0.5
      %v2375 = vadd.f32 %v2263, 0.5
      %v2376 = vadd.f32 %v2264, 0.5
      %v2377 = vadd.f32 %v2265, 0.5
      %v2378 = vadd.f32 %v2266, 0.5
      %v2379 = vadd.f32 %v2267, 0.5
      %v2380 = vadd.f32 %v2268, 0.5
      %v2381 = vadd.f32 %v2269, 0.5
      %v2382 = vadd.f32 %v2270, 0.5
      %v2383 = vadd.f32 %v2271, 0.5
      %v2384 = vadd.f32 %v2272, 0.5
      %v2385 = vadd.f32 %v2273, 0.5
      %v2386 = vadd.f32 %v2274, 0.5
      %v2387 = vadd.f32 %v2275, 0.5
      %v2388 = vadd.f32 %v2276, 0.5
      %v2389 = vadd.f32 %v2277, 0.5
      %v2390 = vadd.f32 %v2278, 0.5
      %v2391 = vadd.f32 %v2279, 0.5
      %v2392 = vadd.f32 %v2280, 0.5
      %v2393 = vadd.f32 %v2281, 0.5
      %v2394 = vadd.f32 %v2282, 0.5
      %v2395 = vadd.f32 %v2283, 0.5
      %v2396 = vadd.f32 %v2284, 0.5
      %v2397 = vadd.f32 %v2285, 0.5
      %v2398 = vadd.f32 %v2286, 0.5
      %v2399 = vadd.f32 %v2287, 0.5
      %v2400 = vadd.f32 %v2288, 0.5
      %v2401 = vadd.f32 %v2289, 0.5
      %v2402 = vadd.f32 %v2290, 0.5
      %v2403 = vadd.f32 %v2291, 0.5
      %v2404 = vadd.f32 %v2292, 0.5
      %v2405 = vadd.f32 %v2293, 0.5
      %v2406 = vadd.f32 %v2294, 0.5
      %v2407 = vadd.f32 %v2295, 0.5
      %v2408 = vadd.f32 %v2296, 0.5
      %v2409 = vadd.f32 %v2297, 0.5
      %v2410 = vadd.f32 %v2298, 0.5
      %v2411 = vadd.f32 %v2299, 0.5
      %v2412 = vadd.f32 %v2300, 0.5
      %v2413 = vadd.f32 %v2301, 0.5
      %v2414 = vadd.f32 %v2302, 0.5
      %v2415 = vadd.f32 %v2303, 0.5
      %v2416 = vadd.f32 %v2304, 0.5
      %v2417 = vadd.f32 %v2305, 0.5
      %v2418 = vadd.f32 %v2306, 0.5
      %v2419 = vadd.f32 %v2307, 0.5
      %v2420 = vadd.f32 %v2308, 0.5
      %v2421 = vadd.f32 %v2309, 0.5
      %v2422 = vadd.f32 %v2310, 0.5
      %v2423 = vadd.f32 %v2311, 0.5
      %v2424 = vadd.f32 %v2312, 0.5
      %v2425 = vadd.f32 %v2313, 0.5
      %v2426 = vadd.f32 %v2314, 0.5
      %v2427 = vadd.f32 %v2315, 0.5
      %v2428 = vadd.f32 %v2316, 0.5
      %v2429 = vadd.f32 %v2317, 0.5
      %v2430 = vadd.f32 %v2318, 0.5
      %v2431 = vadd.f32 %v2319, 0.5
      %v2432 = vadd.f32 %v2320, 0.5
      %v2433 = vadd.f32 %v2321, 0.5
      %v2434 = vadd.f32 %v2322, 0.5
      %v2435 = vadd.f32 %v2323, 0.5
      %v2436 = vadd.f32 %v2324, 0.5
      %v2437 = vadd.f32 %v2325, 0.5
      %v2438 = vadd.f32 %v2326, 0.5
      %v2439 = vadd.f32 %v2327, 0.5
      %v2440 = vadd.f32 %v2328, 0.5
      %v2441 = vadd.f32 %v2329, 0.5
      %v2442 = vadd.f32 %v2330, 0.5
      %v2443 = vadd.f32 %v2331, 0.5
      %v2444 = vadd.f32 %v2332, 0.5
      %v2445 = vadd.f32 %v2333, 0.5
      %v2446 = vadd.f32 %v2334, 0.5
      %v2447 = vadd.f32 %v2335, 0.5
      %v2448 = vadd.f32 %v2336, 0.5
      %v2449 = vadd.f32 %v2337, 0.5
      %v2450 = vadd.f32 %v2338, 0.5
      %v2451 = vadd.f32 %v2339, 0.5
      %v2452 = vadd.f32 %v2340, 0.5
      %v2453 = vadd.f32 %v2341, 0.5
      %v2454 = vadd.f32 %v2342, 0.5
      %v2455 = vadd.f32 %v2343, 0.5
      %v2456 = vadd.f32 %v2344, 0.5
      %v2457 = vadd.f32 %v2345, 0.5
      %v2458 = vadd.f32 %v2346, 0.5
      %v2459 = vadd.f32 %v2347, 0.5
      %v2460 = vadd.f32 %v2348, 0.5
      %v2461 = vadd.f32 %v2349, 0.5
      %v2462 = vadd.f32 %v2350, 0.5
      %v2463 = vadd.f32 %v2351, 0.5
      %v2464 = vadd.f32 %v2352, 0.5
      %v2465 = vpack.c.bf16 %v2360, %v2353
      %v2466 = vpack.c.bf16 %v2361, %v2354
      %v2467 = vpack.c.bf16 %v2362, %v2355
      %v2468 = vpack.c.bf16 %v2363, %v2356
      %v2469 = vpack.c.bf16 %v2364, %v2357
      %v2470 = vpack.c.bf16 %v2365, %v2358
      %v2471 = vpack.c.bf16 %v2366, %v2359
      %v2472 = vpack.c.bf16 %v2374, %v2367
      %v2473 = vpack.c.bf16 %v2375, %v2368
      %v2474 = vpack.c.bf16 %v2376, %v2369
      %v2475 = vpack.c.bf16 %v2377, %v2370
      %v2476 = vpack.c.bf16 %v2378, %v2371
      %v2477 = vpack.c.bf16 %v2379, %v2372
      %v2478 = vpack.c.bf16 %v2380, %v2373
      %v2479 = vpack.c.bf16 %v2388, %v2381
      %v2480 = vpack.c.bf16 %v2389, %v2382
      %v2481 = vpack.c.bf16 %v2390, %v2383
      %v2482 = vpack.c.bf16 %v2391, %v2384
      %v2483 = vpack.c.bf16 %v2392, %v2385
      %v2484 = vpack.c.bf16 %v2393, %v2386
      %v2485 = vpack.c.bf16 %v2394, %v2387
      %v2486 = vpack.c.bf16 %v2402, %v2395
      %v2487 = vpack.c.bf16 %v2403, %v2396
      %v2488 = vpack.c.bf16 %v2404, %v2397
      %v2489 = vpack.c.bf16 %v2405, %v2398
      %v2490 = vpack.c.bf16 %v2406, %v2399
      %v2491 = vpack.c.bf16 %v2407, %v2400
      %v2492 = vpack.c.bf16 %v2408, %v2401
      %v2493 = vpack.c.bf16 %v2416, %v2409
      %v2494 = vpack.c.bf16 %v2417, %v2410
      %v2495 = vpack.c.bf16 %v2418, %v2411
      %v2496 = vpack.c.bf16 %v2419, %v2412
      %v2497 = vpack.c.bf16 %v2420, %v2413
      %v2498 = vpack.c.bf16 %v2421, %v2414
      %v2499 = vpack.c.bf16 %v2422, %v2415
      %v2500 = vpack.c.bf16 %v2430, %v2423
      %v2501 = vpack.c.bf16 %v2431, %v2424
      %v2502 = vpack.c.bf16 %v2432, %v2425
      %v2503 = vpack.c.bf16 %v2433, %v2426
      %v2504 = vpack.c.bf16 %v2434, %v2427
      %v2505 = vpack.c.bf16 %v2435, %v2428
      %v2506 = vpack.c.bf16 %v2436, %v2429
      %v2507 = vpack.c.bf16 %v2444, %v2437
      %v2508 = vpack.c.bf16 %v2445, %v2438
      %v2509 = vpack.c.bf16 %v2446, %v2439
      %v2510 = vpack.c.bf16 %v2447, %v2440
      %v2511 = vpack.c.bf16 %v2448, %v2441
      %v2512 = vpack.c.bf16 %v2449, %v2442
      %v2513 = vpack.c.bf16 %v2450, %v2443
      %v2514 = vpack.c.bf16 %v2458, %v2451
      %v2515 = vpack.c.bf16 %v2459, %v2452
      %v2516 = vpack.c.bf16 %v2460, %v2453
      %v2517 = vpack.c.bf16 %v2461, %v2454
      %v2518 = vpack.c.bf16 %v2462, %v2455
      %v2519 = vpack.c.bf16 %v2463, %v2456
      %v2520 = vpack.c.bf16 %v2464, %v2457
      %v2577 = vunpack.c.l.b16 %v2465
      %v2578 = vunpack.c.l.b16 %v2466
      %v2579 = vunpack.c.l.b16 %v2467
      %v2580 = vunpack.c.l.b16 %v2468
      %v2581 = vunpack.c.l.b16 %v2469
      %v2582 = vunpack.c.l.b16 %v2470
      %v2583 = vunpack.c.l.b16 %v2471
      %v2584 = vunpack.c.h.b16 %v2465
      %v2585 = vunpack.c.h.b16 %v2466
      %v2586 = vunpack.c.h.b16 %v2467
      %v2587 = vunpack.c.h.b16 %v2468
      %v2588 = vunpack.c.h.b16 %v2469
      %v2589 = vunpack.c.h.b16 %v2470
      %v2590 = vunpack.c.h.b16 %v2471
      %v2591 = vunpack.c.l.b16 %v2472
      %v2592 = vunpack.c.l.b16 %v2473
      %v2593 = vunpack.c.l.b16 %v2474
      %v2594 = vunpack.c.l.b16 %v2475
      %v2595 = vunpack.c.l.b16 %v2476
      %v2596 = vunpack.c.l.b16 %v2477
      %v2597 = vunpack.c.l.b16 %v2478
      %v2598 = vunpack.c.h.b16 %v2472
      %v2599 = vunpack.c.h.b16 %v2473
      %v2600 = vunpack.c.h.b16 %v2474
      %v2601 = vunpack.c.h.b16 %v2475
      %v2602 = vunpack.c.h.b16 %v2476
      %v2603 = vunpack.c.h.b16 %v2477
      %v2604 = vunpack.c.h.b16 %v2478
      %v2605 = vunpack.c.l.b16 %v2479
      %v2606 = vunpack.c.l.b16 %v2480
      %v2607 = vunpack.c.l.b16 %v2481
      %v2608 = vunpack.c.l.b16 %v2482
      %v2609 = vunpack.c.l.b16 %v2483
      %v2610 = vunpack.c.l.b16 %v2484
      %v2611 = vunpack.c.l.b16 %v2485
      %v2612 = vunpack.c.h.b16 %v2479
      %v2613 = vunpack.c.h.b16 %v2480
      %v2614 = vunpack.c.h.b16 %v2481
      %v2615 = vunpack.c.h.b16 %v2482
      %v2616 = vunpack.c.h.b16 %v2483
      %v2617 = vunpack.c.h.b16 %v2484
      %v2618 = vunpack.c.h.b16 %v2485
      %v2619 = vunpack.c.l.b16 %v2486
      %v2620 = vunpack.c.l.b16 %v2487
      %v2621 = vunpack.c.l.b16 %v2488
      %v2622 = vunpack.c.l.b16 %v2489
      %v2623 = vunpack.c.l.b16 %v2490
      %v2624 = vunpack.c.l.b16 %v2491
      %v2625 = vunpack.c.l.b16 %v2492
      %v2626 = vunpack.c.h.b16 %v2486
      %v2627 = vunpack.c.h.b16 %v2487
      %v2628 = vunpack.c.h.b16 %v2488
      %v2629 = vunpack.c.h.b16 %v2489
      %v2630 = vunpack.c.h.b16 %v2490
      %v2631 = vunpack.c.h.b16 %v2491
      %v2632 = vunpack.c.h.b16 %v2492
      %v2633 = vunpack.c.l.b16 %v2493
      %v2634 = vunpack.c.l.b16 %v2494
      %v2635 = vunpack.c.l.b16 %v2495
      %v2636 = vunpack.c.l.b16 %v2496
      %v2637 = vunpack.c.l.b16 %v2497
      %v2638 = vunpack.c.l.b16 %v2498
      %v2639 = vunpack.c.l.b16 %v2499
      %v2640 = vunpack.c.h.b16 %v2493
      %v2641 = vunpack.c.h.b16 %v2494
      %v2642 = vunpack.c.h.b16 %v2495
      %v2643 = vunpack.c.h.b16 %v2496
      %v2644 = vunpack.c.h.b16 %v2497
      %v2645 = vunpack.c.h.b16 %v2498
      %v2646 = vunpack.c.h.b16 %v2499
      %v2647 = vunpack.c.l.b16 %v2500
      %v2648 = vunpack.c.l.b16 %v2501
      %v2649 = vunpack.c.l.b16 %v2502
      %v2650 = vunpack.c.l.b16 %v2503
      %v2651 = vunpack.c.l.b16 %v2504
      %v2652 = vunpack.c.l.b16 %v2505
      %v2653 = vunpack.c.l.b16 %v2506
      %v2654 = vunpack.c.h.b16 %v2500
      %v2655 = vunpack.c.h.b16 %v2501
      %v2656 = vunpack.c.h.b16 %v2502
      %v2657 = vunpack.c.h.b16 %v2503
      %v2658 = vunpack.c.h.b16 %v2504
      %v2659 = vunpack.c.h.b16 %v2505
      %v2660 = vunpack.c.h.b16 %v2506
      %v2661 = vunpack.c.l.b16 %v2507
      %v2662 = vunpack.c.l.b16 %v2508
      %v2663 = vunpack.c.l.b16 %v2509
      %v2664 = vunpack.c.l.b16 %v2510
      %v2665 = vunpack.c.l.b16 %v2511
      %v2666 = vunpack.c.l.b16 %v2512
      %v2667 = vunpack.c.l.b16 %v2513
      %v2668 = vunpack.c.h.b16 %v2507
      %v2669 = vunpack.c.h.b16 %v2508
      %v2670 = vunpack.c.h.b16 %v2509
      %v2671 = vunpack.c.h.b16 %v2510
      %v2672 = vunpack.c.h.b16 %v2511
      %v2673 = vunpack.c.h.b16 %v2512
      %v2674 = vunpack.c.h.b16 %v2513
      %v2675 = vunpack.c.l.b16 %v2514
      %v2676 = vunpack.c.l.b16 %v2515
      %v2677 = vunpack.c.l.b16 %v2516
      %v2678 = vunpack.c.l.b16 %v2517
      %v2679 = vunpack.c.l.b16 %v2518
      %v2680 = vunpack.c.l.b16 %v2519
      %v2681 = vunpack.c.l.b16 %v2520
      %v2682 = vunpack.c.h.b16 %v2514
      %v2683 = vunpack.c.h.b16 %v2515
      %v2684 = vunpack.c.h.b16 %v2516
      %v2685 = vunpack.c.h.b16 %v2517
      %v2686 = vunpack.c.h.b16 %v2518
      %v2687 = vunpack.c.h.b16 %v2519
      %v2688 = vunpack.c.h.b16 %v2520
      %v2689 = vpack.c.b16 %v2578, %v2577
      %v2690 = vpack.c.b16 %v2580, %v2579
      %v2691 = vpack.c.b16 %v2582, %v2581
      %v2692 = vpack.c.b16 %v2583, %v2583
      %v2693 = vpack.c.b16 %v2585, %v2584
      %v2694 = vpack.c.b16 %v2587, %v2586
      %v2695 = vpack.c.b16 %v2589, %v2588
      %v2696 = vpack.c.b16 %v2590, %v2590
      %v2697 = vpack.c.b16 %v2592, %v2591
      %v2698 = vpack.c.b16 %v2594, %v2593
      %v2699 = vpack.c.b16 %v2596, %v2595
      %v2700 = vpack.c.b16 %v2597, %v2597
      %v2701 = vpack.c.b16 %v2599, %v2598
      %v2702 = vpack.c.b16 %v2601, %v2600
      %v2703 = vpack.c.b16 %v2603, %v2602
      %v2704 = vpack.c.b16 %v2604, %v2604
      %v2705 = vpack.c.b16 %v2606, %v2605
      %v2706 = vpack.c.b16 %v2608, %v2607
      %v2707 = vpack.c.b16 %v2610, %v2609
      %v2708 = vpack.c.b16 %v2611, %v2611
      %v2709 = vpack.c.b16 %v2613, %v2612
      %v2710 = vpack.c.b16 %v2615, %v2614
      %v2711 = vpack.c.b16 %v2617, %v2616
      %v2712 = vpack.c.b16 %v2618, %v2618
      %v2713 = vpack.c.b16 %v2620, %v2619
      %v2714 = vpack.c.b16 %v2622, %v2621
      %v2715 = vpack.c.b16 %v2624, %v2623
      %v2716 = vpack.c.b16 %v2625, %v2625
      %v2717 = vpack.c.b16 %v2627, %v2626
      %v2718 = vpack.c.b16 %v2629, %v2628
      %v2719 = vpack.c.b16 %v2631, %v2630
      %v2720 = vpack.c.b16 %v2632, %v2632
      %v2721 = vpack.c.b16 %v2634, %v2633
      %v2722 = vpack.c.b16 %v2636, %v2635
      %v2723 = vpack.c.b16 %v2638, %v2637
      %v2724 = vpack.c.b16 %v2639, %v2639
      %v2725 = vpack.c.b16 %v2641, %v2640
      %v2726 = vpack.c.b16 %v2643, %v2642
      %v2727 = vpack.c.b16 %v2645, %v2644
      %v2728 = vpack.c.b16 %v2646, %v2646
      %v2729 = vpack.c.b16 %v2648, %v2647
      %v2730 = vpack.c.b16 %v2650, %v2649
      %v2731 = vpack.c.b16 %v2652, %v2651
      %v2732 = vpack.c.b16 %v2653, %v2653
      %v2733 = vpack.c.b16 %v2655, %v2654
      %v2734 = vpack.c.b16 %v2657, %v2656
      %v2735 = vpack.c.b16 %v2659, %v2658
      %v2736 = vpack.c.b16 %v2660, %v2660
      %v2737 = vpack.c.b16 %v2662, %v2661
      %v2738 = vpack.c.b16 %v2664, %v2663
      %v2739 = vpack.c.b16 %v2666, %v2665
      %v2740 = vpack.c.b16 %v2667, %v2667
      %v2741 = vpack.c.b16 %v2669, %v2668
      %v2742 = vpack.c.b16 %v2671, %v2670
      %v2743 = vpack.c.b16 %v2673, %v2672
      %v2744 = vpack.c.b16 %v2674, %v2674
      %v2745 = vpack.c.b16 %v2676, %v2675
      %v2746 = vpack.c.b16 %v2678, %v2677
      %v2747 = vpack.c.b16 %v2680, %v2679
      %v2748 = vpack.c.b16 %v2681, %v2681
      %v2749 = vpack.c.b16 %v2683, %v2682
      %v2750 = vpack.c.b16 %v2685, %v2684
      %v2751 = vpack.c.b16 %v2687, %v2686
      %v2752 = vpack.c.b16 %v2688, %v2688
      %2817 = vst [vmem:[%s282] sm:$0xff] %v2689
      %2818 = vst [vmem:[%s282 + $0x8] sm:$0xff] %v2690
      %2819 = vst [vmem:[%s282 + $0x10] sm:$0xff] %v2691
      %vm2820 = vcmask 125952
      %2821 = vst.msk [vmem:[%s282 + $0x18] sm:$0xf] %vm2820, %v2692
      %2822 = vst [vmem:[%s282 + $0x1c] sm:$0xff] %v2693
      %2823 = vst [vmem:[%s282 + $0x24] sm:$0xff] %v2694
      %2824 = vst [vmem:[%s282 + $0x2c] sm:$0xff] %v2695
      %2825 = vst.msk [vmem:[%s282 + $0x34] sm:$0xf] %vm2820, %v2696
      %2826 = vst [vmem:[%s282 + $0x38] sm:$0xff] %v2697
      %2827 = vst [vmem:[%s282 + $0x40] sm:$0xff] %v2698
      %2828 = vst [vmem:[%s282 + $0x48] sm:$0xff] %v2699
      %2829 = vst.msk [vmem:[%s282 + $0x50] sm:$0xf] %vm2820, %v2700
      %2830 = vst [vmem:[%s282 + $0x54] sm:$0xff] %v2701
      %2831 = vst [vmem:[%s282 + $0x5c] sm:$0xff] %v2702
      %2832 = vst [vmem:[%s282 + $0x64] sm:$0xff] %v2703
      %2833 = vst.msk [vmem:[%s282 + $0x6c] sm:$0xf] %vm2820, %v2704
      %2834 = vst [vmem:[%s282 + $0x70] sm:$0xff] %v2705
      %2835 = vst [vmem:[%s282 + $0x78] sm:$0xff] %v2706
      %2836 = vst [vmem:[%s282 + $0x80] sm:$0xff] %v2707
      %2837 = vst.msk [vmem:[%s282 + $0x88] sm:$0xf] %vm2820, %v2708
      %2838 = vst [vmem:[%s282 + $0x8c] sm:$0xff] %v2709
      %2839 = vst [vmem:[%s282 + $0x94] sm:$0xff] %v2710
      %2840 = vst [vmem:[%s282 + $0x9c] sm:$0xff] %v2711
      %2841 = vst.msk [vmem:[%s282 + $0xa4] sm:$0xf] %vm2820, %v2712
      %2842 = vst [vmem:[%s282 + $0xa8] sm:$0xff] %v2713
      %2843 = vst [vmem:[%s282 + $0xb0] sm:$0xff] %v2714
      %2844 = vst [vmem:[%s282 + $0xb8] sm:$0xff] %v2715
      %2845 = vst.msk [vmem:[%s282 + $0xc0] sm:$0xf] %vm2820, %v2716
      %2846 = vst [vmem:[%s282 + $0xc4] sm:$0xff] %v2717
      %2847 = vst [vmem:[%s282 + $0xcc] sm:$0xff] %v2718
      %2848 = vst [vmem:[%s282 + $0xd4] sm:$0xff] %v2719
      %2849 = vst.msk [vmem:[%s282 + $0xdc] sm:$0xf] %vm2820, %v2720
      %2850 = vst [vmem:[%s282 + $0xe0] sm:$0xff] %v2721
      %2851 = vst [vmem:[%s282 + $0xe8] sm:$0xff] %v2722
      %2852 = vst [vmem:[%s282 + $0xf0] sm:$0xff] %v2723
      %2853 = vst.msk [vmem:[%s282 + $0xf8] sm:$0xf] %vm2820, %v2724
      %2854 = vst [vmem:[%s282 + $0xfc] sm:$0xff] %v2725
      %2855 = vst [vmem:[%s282 + $0x104] sm:$0xff] %v2726
      %2856 = vst [vmem:[%s282 + $0x10c] sm:$0xff] %v2727
      %2857 = vst.msk [vmem:[%s282 + $0x114] sm:$0xf] %vm2820, %v2728
      %2858 = vst [vmem:[%s282 + $0x118] sm:$0xff] %v2729
      %2859 = vst [vmem:[%s282 + $0x120] sm:$0xff] %v2730
      %2860 = vst [vmem:[%s282 + $0x128] sm:$0xff] %v2731
      %2861 = vst.msk [vmem:[%s282 + $0x130] sm:$0xf] %vm2820, %v2732
      %2862 = vst [vmem:[%s282 + $0x134] sm:$0xff] %v2733
      %2863 = vst [vmem:[%s282 + $0x13c] sm:$0xff] %v2734
      %2864 = vst [vmem:[%s282 + $0x144] sm:$0xff] %v2735
      %2865 = vst.msk [vmem:[%s282 + $0x14c] sm:$0xf] %vm2820, %v2736
      %2866 = vst [vmem:[%s282 + $0x150] sm:$0xff] %v2737
      %2867 = vst [vmem:[%s282 + $0x158] sm:$0xff] %v2738
      %2868 = vst [vmem:[%s282 + $0x160] sm:$0xff] %v2739
      %2869 = vst.msk [vmem:[%s282 + $0x168] sm:$0xf] %vm2820, %v2740
      %2870 = vst [vmem:[%s282 + $0x16c] sm:$0xff] %v2741
      %2871 = vst [vmem:[%s282 + $0x174] sm:$0xff] %v2742
      %2872 = vst [vmem:[%s282 + $0x17c] sm:$0xff] %v2743
      %2873 = vst.msk [vmem:[%s282 + $0x184] sm:$0xf] %vm2820, %v2744
      %2874 = vst [vmem:[%s282 + $0x188] sm:$0xff] %v2745
      %2875 = vst [vmem:[%s282 + $0x190] sm:$0xff] %v2746
      %2876 = vst [vmem:[%s282 + $0x198] sm:$0xff] %v2747
      %2877 = vst.msk [vmem:[%s282 + $0x1a0] sm:$0xf] %vm2820, %v2748
      %2878 = vst [vmem:[%s282 + $0x1a4] sm:$0xff] %v2749
      %2879 = vst [vmem:[%s282 + $0x1ac] sm:$0xff] %v2750
      %2880 = vst [vmem:[%s282 + $0x1b4] sm:$0xff] %v2751
      %2881 = vst.msk [vmem:[%s282 + $0x1bc] sm:$0xf] %vm2820, %v2752
      %s2882 = smul.u32 16, %s18
      %p2883 = scmp.lt.s32.totalorder %s2882, 31
      %s2884 = scalar_select %p2883, %s2882, 31
      %s2885 = smul.addr %s2884, 7
      %s2886 = smul.addr %s2885, 4
      %s2887 = scalar_lea.vmem %s7, %s2886
      // Predicated region
      $region49: #{generator_forward.1} parent=47 // pred_check
        %p2888 = pneg %p188
      $region50: #{generator_forward.1} parent=47 // pred_check_branch
        %2890 = sbr.rel (%p2888) target = $region52
      $region51: #{generator_forward.1} parent=47 // pred_region
        %s2891 = smul.u32 16, %s18
      $region52: #{generator_forward.1} parent=47 // pred_fallthru
        _
    $region48: #{generator_forward.1} parent=5 // pred_fallthru
      _
    %p2892 = scmp.le.s32.totalorder 2, %s13
    // Predicated region
    $region53: #{generator_forward.1} parent=5 // pred_check
      %p2893 = pneg %p2892
    $region54: #{generator_forward.1} parent=5 // pred_check_branch
      %2895 = sbr.rel (%p2893) target = $region56
    $region55: #{generator_forward.1} parent=5 // pred_region
      %s2896 = ssub.s32 %s13, 2
      // Predicated region
      $region57: #{generator_forward.1} parent=55 // pred_check
        %p2897 = pneg %p194
      $region58: #{generator_forward.1} parent=55 // pred_check_branch
        %2899 = sbr.rel (%p2897) target = $region60
      $region59: #{generator_forward.1} parent=55 // pred_region
        %s2900 = smul.u32 16, %s19
        %p2901 = scmp.lt.s32.totalorder %s2900, 31
        %s2902 = scalar_select %p2901, %s2900, 31
        %s2903 = smul.addr %s2902, 7
        %s2904 = smul.addr %s2903, 4
        %s2905 = scalar_lea.vmem %s7, %s2904
      $region60: #{generator_forward.1} parent=55 // pred_fallthru
        _
    $region56: #{generator_forward.1} parent=5 // pred_fallthru
      _
  $region6: #{generator_forward.1} parent=0 // loop_footer
    %s17 = sadd.s32 1, %s13
  $region7: #{generator_forward.1} parent=0 // loop_footer_branch
    %12 = sbr.rel target = $region3
  $region8: #{generator_forward.1} parent=0 // loop_exit
    _

</llo_original>
